<compile_context>
chip_gen: v7x
topology: tpu7x:2x2x1
jax: 0.10.0
libtpu: 0.0.40
codegen_flags: <defaults>
</compile_context>

<pallas_src>
import functools

import numpy as np
import jax
import jax.numpy as jnp
from jax import lax
from jax.experimental import pallas as pl
from jax.experimental.pallas import tpu as pltpu

# ---- static configuration (mirrors the globals used by Filter_network) ------
BS = 2                       # batchSize
CNN_N_FILT = (9, 8)          # cnn_N_filt   (N1 = N0 - 1, required by channel diff)
CNN_LEN_FILT = (17, 17)      # cnn_len_filt
N0, N1 = CNN_N_FILT
K0 = CNN_LEN_FILT[0] - 1     # fixed filter length    (16 taps)
K1 = CNN_LEN_FILT[1] - 1     # variable filter length (16 taps)
T_IN = 143                   # input samples
T1 = T_IN - K0 + 1           # 128 samples after fixed conv (and after variable conv)
NFREQ = T1 // 2 + 1          # 65 rfft bins
NFP = 128                    # rfft bins zero-padded to a full lane tile
FS = 16000.0                 # fs
QOUT_SCALE, QOUT_YSHIFT = 2.0, 3.0
QOUT_SCALE_FM, QOUT_YSHIFT_FM = 1.5, 0.5
BN_EPS = 1e-5


# ------------------------------- Pallas kernel -------------------------------
def _filter_network_kernel(xm_ref, xt_ref, wdiff_ref, wvar_ref, prev_ref,
                           dft_ref, mask_ref, fscale_ref, fcvar_ref,
                           wh_ref, bh_ref, wh2_ref, bh2_ref, wq_ref, bq_ref,
                           filtout_ref, misc_ref):
    f32 = jnp.float32
    xm = xm_ref[...]                      # (BS, T1)   x[:, :128]
    xt = xt_ref[...]                      # (BS, T1)   x[:, 128:143] in lanes 0..14
    wdiff = wdiff_ref[...]                # (N1, K0)   diff-folded fixed-conv weights

    lane2 = lax.broadcasted_iota(jnp.int32, (BS, T1), 1)
    lane3 = lax.broadcasted_iota(jnp.int32, (BS, N1, T1), 2)

    # ---- fixed conv with the channel difference folded into wdiff -----------
    # sd[b, c, t] = sum_k x[b, t+k] * wdiff[c, k]     (torch conv1d = correlation)
    sd = jnp.zeros((BS, N1, T1), f32)
    for k in range(K0):
        if k == 0:
            xk = xm
        else:
            # xk[t] = x[t+k]: lanes that wrap past t+k >= T1 come from x_tail.
            comb = jnp.where(lane2 < k, xt, xm)
            xk = pltpu.roll(comb, shift=T1 - k, axis=1)
        sd = sd + xk[:, None, :] * wdiff[None, :, k:k + 1]

    # ---- depthwise variable conv over [prevFrame | sd] (no lane concat) ------
    prev_ext = prev_ref[...]              # (BS, N1, T1), prev in lanes T1-15..T1-1
    wvar = wvar_ref[...]                  # (BS, N1, K1)
    acc = jnp.zeros((BS, N1, T1), f32)
    for k in range(K1):
        s = (K1 - 1) - k                  # right-shift for this tap
        if s == 0:
            src = sd
        else:
            # src[t] = padded[t+k] with padded = [prev(15) | sd(128)]
            comb = jnp.where(lane3 >= T1 - s, prev_ext, sd)
            src = pltpu.roll(comb, shift=s, axis=2)
        acc = acc + src * wvar[:, :, k:k + 1]
    filtout_ref[...] = acc

    # ---- |rfft| via one lane-dense MXU matmul against [cos | sin] ------------
    # (rfft uses -sin; the sign is irrelevant because only |.| is used.)
    # Kept f32 (HIGHEST): the BS=2 batch-norm below amplifies small centroid
    # perturbations into sign flips relative to the f32 reference.
    spec = jnp.dot(acc.reshape(BS * N1, T1), dft_ref[...],
                   precision=lax.Precision.HIGHEST,
                   preferred_element_type=f32)          # (BS*N1, 2*NFP)
    re = spec[:, :NFP]
    im = spec[:, NFP:]
    mag = jnp.sqrt(re * re + im * im).reshape(BS, N1, NFP) * mask_ref[...]

    # ---- spectral centroid and distance to nominal center frequency ---------
    num = jnp.sum(mag * fscale_ref[...], axis=2, keepdims=True)   # (BS, N1, 1)
    den = jnp.sum(mag, axis=2, keepdims=True)
    scf = num / den           # exact divide: BN below is sensitive to tiny errors

    # switch to (N1, BS): channels on sublanes, batch on lanes
    scf_x = jnp.concatenate([scf[b] for b in range(BS)], axis=1)  # (N1, BS)
    fm_raw = jnp.abs(scf_x - fcvar_ref[...])                      # (N1, BS)

    # BatchNorm1d, batch statistics (freshly constructed module: gamma=1, beta=0)
    mu = jnp.mean(fm_raw, axis=1, keepdims=True)
    var = jnp.mean((fm_raw - mu) ** 2, axis=1, keepdims=True)
    fm = (fm_raw - mu) * lax.rsqrt(var + BN_EPS)                  # (N1, BS)

    # ---- energy of the (unpadded) difference signal --------------------------
    qin_c = jnp.mean(jnp.abs(sd), axis=2, keepdims=True)          # (BS, N1, 1)
    qin = jnp.concatenate([qin_c[b] for b in range(BS)], axis=1)  # (N1, BS)

    # ---- small MLP head: torch Linear == W @ x_col + b (no broadcast_to) -----
    def linear(w_ref, b_ref, v):          # v: (N1, BS)
        return jnp.dot(w_ref[...], v, preferred_element_type=f32) + b_ref[...]

    h = jnp.maximum(linear(wh_ref, bh_ref, fm), 0.0)
    hmid = QOUT_SCALE_FM * jnp.tanh(linear(wh2_ref, bh2_ref, h)) + QOUT_YSHIFT_FM
    qhid = QOUT_SCALE * jnp.tanh(linear(wq_ref, bq_ref, qin)) + QOUT_YSHIFT + hmid

    # ---- pack narrow results into one lane-dense output slab -----------------
    # lanes [0,15): prevFrame = sd[:, :, T1-15:], lane 15: Qhidden, lane 16: fm
    tail = pltpu.roll(sd, shift=K1 - 1, axis=2)        # lanes 0..14 = sd[:, :, 113:]
    qhid_col = jnp.stack([qhid[:, b:b + 1] for b in range(BS)], axis=0)  # (BS,N1,1)
    fm_col = jnp.stack([fm[:, b:b + 1] for b in range(BS)], axis=0)      # (BS,N1,1)
    misc = jnp.where(lane3 < K1 - 1, tail, 0.0)
    misc = jnp.where(lane3 == K1 - 1, qhid_col, misc)
    misc = jnp.where(lane3 == K1, fm_col, misc)
    misc_ref[...] = misc


# --------------------------- precomputed DFT table ----------------------------
def _build_dft_matrix():
    t = np.arange(T1, dtype=np.float64)[:, None]
    f = np.arange(NFREQ, dtype=np.float64)[None, :]
    ang = 2.0 * np.pi * t * f / T1
    m = np.zeros((T1, 2 * NFP), np.float32)
    m[:, :NFREQ] = np.cos(ang)
    m[:, NFP:NFP + NFREQ] = np.sin(ang)     # sign irrelevant (magnitude only)
    return jnp.asarray(m)


_DFT_MAT = _build_dft_matrix()


# ------------------------------- JAX wrapper ----------------------------------
@jax.jit
def filter_network_forward(x, wfix, wvar, prev_frame, filter_mask, freq_scale,
                           fc_var_tiled, wh, bh, wh2, bh2, wq, bq):
    f32 = jnp.float32
    # Layout plumbing only (lane-dense kernel inputs); fused/cheap under jit.
    wdiff = (wfix[1:, :] - wfix[:-1, :]).astype(f32)               # folded channel diff
    x_main = x[:, :T1].astype(f32)
    x_tail = jnp.zeros((BS, T1), f32).at[:, :T_IN - T1].set(x[:, T1:])
    prev_ext = jnp.zeros((BS, N1, T1), f32).at[:, :, T1 - (K1 - 1):].set(prev_frame)
    mask3 = jnp.zeros((1, N1, NFP), f32).at[:, :, :NFREQ].set(filter_mask[None])
    fscale3 = jnp.zeros((1, 1, NFP), f32).at[:, :, :NFREQ].set(freq_scale[None, None, :])
    fcvar_x = jnp.transpose(fc_var_tiled)                          # (N1, BS)

    ins = [x_main, x_tail, wdiff, wvar, prev_ext, _DFT_MAT, mask3, fscale3,
           fcvar_x, wh, bh.reshape(N1, 1), wh2, bh2.reshape(N1, 1),
           wq, bq.reshape(N1, 1)]

    vmem = functools.partial(pl.BlockSpec, memory_space=pltpu.MemorySpace.VMEM)
    out_shape = (
        jax.ShapeDtypeStruct((BS, N1, T1), jnp.float32),   # filtout
        jax.ShapeDtypeStruct((BS, N1, T1), jnp.float32),   # packed prev/qhid/fm slab
    )
    # TODO(synk): the module's forward handles a single frame, so there is no
    # grid axis to shard across the two v7x TensorCores; a multi-frame variant
    # would add a leading grid with dimension_semantics=("parallel",).
    filtout, misc = pl.pallas_call(
        _filter_network_kernel,
        out_shape=out_shape,
        in_specs=[vmem() for _ in ins],
        out_specs=tuple(vmem() for _ in out_shape),
    )(*ins)

    prev_out = misc[:, :, :K1 - 1]       # (BS, N1, 15)
    qhid = misc[:, :, K1 - 1]            # (BS, N1)
    fm = misc[:, :, K1]                  # (BS, N1)
    return filtout, prev_out, qhid, fm


# --------------------------- deterministic parameters -------------------------
def _gabor(fc_hz, q, length):
    # TODO(synk): gabor_variableResponse / gabor_fixedResponse are not defined in
    # the reference source; this deterministic Gabor synthesis stands in for them.
    t = (jnp.arange(length, dtype=jnp.float32) - (length - 1) / 2.0) / FS
    fc_hz = fc_hz[..., None]
    q = q[..., None]
    sigma = q / (2.0 * jnp.pi * fc_hz)
    g = jnp.exp(-0.5 * (t / sigma) ** 2) * jnp.cos(2.0 * jnp.pi * fc_hz * t)
    return (g / (jnp.sum(jnp.abs(g), axis=-1, keepdims=True) + 1e-6)).astype(jnp.float32)


# --------------------------- pure-JAX reference -------------------------------
def reference_forward(x, wfix, wvar, prev_frame, filter_mask, freq_scale,
                      fc_var_tiled, wh, bh, wh2, bh2, wq, bq):
    acc0 = jnp.zeros((BS, N0, T1), jnp.float32)
    for k in range(K0):
        acc0 = acc0 + x[:, None, k:k + T1] * wfix[None, :, k:k + 1]
    sd = acc0[:, 1:, :] - acc0[:, :-1, :]
    padded = jnp.concatenate([prev_frame, sd], axis=2)
    acc = jnp.zeros((BS, N1, T1), jnp.float32)
    for k in range(K1):
        acc = acc + padded[:, :, k:k + T1] * wvar[:, :, k:k + 1]
    mag = jnp.abs(jnp.fft.rfft(acc, axis=2)).astype(jnp.float32) * filter_mask[None]
    scf = jnp.sum(mag * freq_scale[None, None, :], axis=2) / jnp.sum(mag, axis=2)
    fm = jnp.abs(scf - fc_var_tiled)
    mu = jnp.mean(fm, axis=0, keepdims=True)
    var = jnp.mean((fm - mu) ** 2, axis=0, keepdims=True)
    fm = (fm - mu) / jnp.sqrt(var + BN_EPS)
    qin = jnp.mean(jnp.abs(sd), axis=2)
    h = jax.nn.relu(fm @ wh.T + bh)
    hmid = QOUT_SCALE_FM * jnp.tanh(h @ wh2.T + bh2) + QOUT_YSHIFT_FM
    qhid = QOUT_SCALE * jnp.tanh(qin @ wq.T + bq) + QOUT_YSHIFT + hmid
    prev_out = sd[:, :, T1 - (K1 - 1):]
    return acc, prev_out, qhid, fm


if __name__ == "__main__":
    key = jax.random.PRNGKey(0)
    ks = jax.random.split(key, 8)

    # forward-pass inputs (qInitial / prevEn are unused by forward, as in PyTorch)
    x_in = jax.random.normal(ks[0], (BS, T_IN), jnp.float32)
    q_prev = 2.0 + 6.0 * jax.random.uniform(ks[1], (BS, N1), dtype=jnp.float32)
    prev_frame = 0.1 * jax.random.normal(ks[2], (BS, N1, K1 - 1), jnp.float32)
    q_initial = jnp.zeros((BS, N1), jnp.float32)   # unused
    prev_en = jnp.zeros((BS, N1), jnp.float32)     # unused

    # fixed + QPrev-dependent variable Gabor filter banks (glue, plain JAX)
    fc_fixed = jnp.linspace(200.0, 3200.0, N0).astype(jnp.float32)
    fc_variable = jnp.linspace(300.0, 3000.0, N1).astype(jnp.float32)
    wfix = _gabor(fc_fixed, jnp.full((N0,), 5.0, jnp.float32), K0)          # filtersFixed
    wvar = _gabor(jnp.broadcast_to(fc_variable, (BS, N1)), q_prev, K1)      # gaborVar(QPrev)

    freq_scale = (jnp.arange(NFREQ, dtype=jnp.float32) * FS / T1)           # FreqScale1
    filter_mask = jnp.ones((N1, NFREQ), jnp.float32).at[:, 0].set(0.0)      # filter_mask
    fc_var_tiled = jnp.broadcast_to(fc_variable, (BS, N1)).astype(jnp.float32)

    def lin_init(k):
        kw, kb = jax.random.split(k)
        w = jax.random.normal(kw, (N1, N1), jnp.float32) / jnp.sqrt(N1)
        b = 0.1 * jax.random.normal(kb, (N1,), jnp.float32)
        return w, b

    wh, bh = lin_init(ks[3])     # QoutLayerHidden  (hidden_weights / hidden_biases)
    wh2, bh2 = lin_init(ks[4])   # QoutLayerHidden2 (Qout_weightsFM / Qout_biasesFM)
    wq, bq = lin_init(ks[5])     # QoutLayer        (Qout_weights / Qout_biases)

    args = (x_in, wfix, wvar, prev_frame, filter_mask, freq_scale,
            fc_var_tiled, wh, bh, wh2, bh2, wq, bq)

    outs = jax.block_until_ready(filter_network_forward(*args))
    refs = reference_forward(*args)
    for o, r in zip(outs, refs):
        assert o.shape == r.shape, (o.shape, r.shape)
        assert bool(jnp.all(jnp.isfinite(o)))
        assert bool(jnp.allclose(o, r, rtol=5e-2, atol=5e-2)), float(jnp.max(jnp.abs(o - r)))

    print("KERNEL_OK")
</pallas_src>

<mosaic_0001>
module attributes {stable_mosaic.version = 11 : i64} {
  func.func @_filter_network_kernel(%arg0: memref<2x128xf32, #tpu.memory_space<vmem>>, %arg1: memref<2x128xf32, #tpu.memory_space<vmem>>, %arg2: memref<8x16xf32, #tpu.memory_space<vmem>>, %arg3: memref<2x8x16xf32, #tpu.memory_space<vmem>>, %arg4: memref<2x8x128xf32, #tpu.memory_space<vmem>>, %arg5: memref<128x256xf32, #tpu.memory_space<vmem>>, %arg6: memref<1x8x128xf32, #tpu.memory_space<vmem>>, %arg7: memref<1x1x128xf32, #tpu.memory_space<vmem>>, %arg8: memref<8x2xf32, #tpu.memory_space<vmem>>, %arg9: memref<8x8xf32, #tpu.memory_space<vmem>>, %arg10: memref<8x1xf32, #tpu.memory_space<vmem>>, %arg11: memref<8x8xf32, #tpu.memory_space<vmem>>, %arg12: memref<8x1xf32, #tpu.memory_space<vmem>>, %arg13: memref<8x8xf32, #tpu.memory_space<vmem>>, %arg14: memref<8x1xf32, #tpu.memory_space<vmem>>, %arg15: memref<2x8x128xf32, #tpu.memory_space<vmem>>, %arg16: memref<2x8x128xf32, #tpu.memory_space<vmem>>) attributes {dimension_semantics = [], scalar_prefetch = 0 : i64, scratch_operands = 0 : i64, tpu.core_type = #tpu.core_type<tc>} {
    %c0 = arith.constant 0 : index
    %c0_0 = arith.constant 0 : index
    %0 = vector.load %arg0[%c0, %c0_0] : memref<2x128xf32, #tpu.memory_space<vmem>>, vector<2x128xf32>
    %c0_1 = arith.constant 0 : index
    %c0_2 = arith.constant 0 : index
    %1 = vector.load %arg1[%c0_1, %c0_2] : memref<2x128xf32, #tpu.memory_space<vmem>>, vector<2x128xf32>
    %c0_3 = arith.constant 0 : index
    %c0_4 = arith.constant 0 : index
    %2 = vector.load %arg2[%c0_3, %c0_4] : memref<8x16xf32, #tpu.memory_space<vmem>>, vector<8x16xf32>
    %3 = tpu.iota {dimensions = array<i32: 1>} : vector<2x128xi32>
    %4 = tpu.iota {dimensions = array<i32: 2>} : vector<2x8x128xi32>
    %cst = arith.constant 0.000000e+00 : f32
    %5 = vector.broadcast %cst : f32 to vector<2x8x128xf32>
    %6 = vector.shape_cast %0 : vector<2x128xf32> to vector<2x1x128xf32>
    %7 = vector.extract_strided_slice %2 {offsets = [0, 0], sizes = [8, 1], strides = [1, 1]} : vector<8x16xf32> to vector<8x1xf32>
    %8 = vector.shape_cast %7 : vector<8x1xf32> to vector<1x8x1xf32>
    %9 = vector.broadcast %6 : vector<2x1x128xf32> to vector<2x8x128xf32>
    %10 = vector.broadcast %8 : vector<1x8x1xf32> to vector<2x8x128xf32>
    %11 = arith.mulf %9, %10 : vector<2x8x128xf32>
    %12 = arith.addf %5, %11 : vector<2x8x128xf32>
    %c1_i32 = arith.constant 1 : i32
    %13 = vector.broadcast %c1_i32 : i32 to vector<2x128xi32>
    %14 = arith.cmpi slt, %3, %13 : vector<2x128xi32>
    %15 = arith.select %14, %1, %0 : vector<2x128xi1>, vector<2x128xf32>
    %c127_i32 = arith.constant 127 : i32
    %16 = tpu.dynamic_rotate %15 by %c127_i32 dim 1 : vector<2x128xf32>, i32 -> vector<2x128xf32>
    %17 = vector.shape_cast %16 : vector<2x128xf32> to vector<2x1x128xf32>
    %18 = vector.extract_strided_slice %2 {offsets = [0, 1], sizes = [8, 1], strides = [1, 1]} : vector<8x16xf32> to vector<8x1xf32>
    %19 = vector.shape_cast %18 : vector<8x1xf32> to vector<1x8x1xf32>
    %20 = vector.broadcast %17 : vector<2x1x128xf32> to vector<2x8x128xf32>
    %21 = vector.broadcast %19 : vector<1x8x1xf32> to vector<2x8x128xf32>
    %22 = arith.mulf %20, %21 : vector<2x8x128xf32>
    %23 = arith.addf %12, %22 : vector<2x8x128xf32>
    %c2_i32 = arith.constant 2 : i32
    %24 = vector.broadcast %c2_i32 : i32 to vector<2x128xi32>
    %25 = arith.cmpi slt, %3, %24 : vector<2x128xi32>
    %26 = arith.select %25, %1, %0 : vector<2x128xi1>, vector<2x128xf32>
    %c126_i32 = arith.constant 126 : i32
    %27 = tpu.dynamic_rotate %26 by %c126_i32 dim 1 : vector<2x128xf32>, i32 -> vector<2x128xf32>
    %28 = vector.shape_cast %27 : vector<2x128xf32> to vector<2x1x128xf32>
    %29 = vector.extract_strided_slice %2 {offsets = [0, 2], sizes = [8, 1], strides = [1, 1]} : vector<8x16xf32> to vector<8x1xf32>
    %30 = vector.shape_cast %29 : vector<8x1xf32> to vector<1x8x1xf32>
    %31 = vector.broadcast %28 : vector<2x1x128xf32> to vector<2x8x128xf32>
    %32 = vector.broadcast %30 : vector<1x8x1xf32> to vector<2x8x128xf32>
    %33 = arith.mulf %31, %32 : vector<2x8x128xf32>
    %34 = arith.addf %23, %33 : vector<2x8x128xf32>
    %c3_i32 = arith.constant 3 : i32
    %35 = vector.broadcast %c3_i32 : i32 to vector<2x128xi32>
    %36 = arith.cmpi slt, %3, %35 : vector<2x128xi32>
    %37 = arith.select %36, %1, %0 : vector<2x128xi1>, vector<2x128xf32>
    %c125_i32 = arith.constant 125 : i32
    %38 = tpu.dynamic_rotate %37 by %c125_i32 dim 1 : vector<2x128xf32>, i32 -> vector<2x128xf32>
    %39 = vector.shape_cast %38 : vector<2x128xf32> to vector<2x1x128xf32>
    %40 = vector.extract_strided_slice %2 {offsets = [0, 3], sizes = [8, 1], strides = [1, 1]} : vector<8x16xf32> to vector<8x1xf32>
    %41 = vector.shape_cast %40 : vector<8x1xf32> to vector<1x8x1xf32>
    %42 = vector.broadcast %39 : vector<2x1x128xf32> to vector<2x8x128xf32>
    %43 = vector.broadcast %41 : vector<1x8x1xf32> to vector<2x8x128xf32>
    %44 = arith.mulf %42, %43 : vector<2x8x128xf32>
    %45 = arith.addf %34, %44 : vector<2x8x128xf32>
    %c4_i32 = arith.constant 4 : i32
    %46 = vector.broadcast %c4_i32 : i32 to vector<2x128xi32>
    %47 = arith.cmpi slt, %3, %46 : vector<2x128xi32>
    %48 = arith.select %47, %1, %0 : vector<2x128xi1>, vector<2x128xf32>
    %c124_i32 = arith.constant 124 : i32
    %49 = tpu.dynamic_rotate %48 by %c124_i32 dim 1 : vector<2x128xf32>, i32 -> vector<2x128xf32>
    %50 = vector.shape_cast %49 : vector<2x128xf32> to vector<2x1x128xf32>
    %51 = vector.extract_strided_slice %2 {offsets = [0, 4], sizes = [8, 1], strides = [1, 1]} : vector<8x16xf32> to vector<8x1xf32>
    %52 = vector.shape_cast %51 : vector<8x1xf32> to vector<1x8x1xf32>
    %53 = vector.broadcast %50 : vector<2x1x128xf32> to vector<2x8x128xf32>
    %54 = vector.broadcast %52 : vector<1x8x1xf32> to vector<2x8x128xf32>
    %55 = arith.mulf %53, %54 : vector<2x8x128xf32>
    %56 = arith.addf %45, %55 : vector<2x8x128xf32>
    %c5_i32 = arith.constant 5 : i32
    %57 = vector.broadcast %c5_i32 : i32 to vector<2x128xi32>
    %58 = arith.cmpi slt, %3, %57 : vector<2x128xi32>
    %59 = arith.select %58, %1, %0 : vector<2x128xi1>, vector<2x128xf32>
    %c123_i32 = arith.constant 123 : i32
    %60 = tpu.dynamic_rotate %59 by %c123_i32 dim 1 : vector<2x128xf32>, i32 -> vector<2x128xf32>
    %61 = vector.shape_cast %60 : vector<2x128xf32> to vector<2x1x128xf32>
    %62 = vector.extract_strided_slice %2 {offsets = [0, 5], sizes = [8, 1], strides = [1, 1]} : vector<8x16xf32> to vector<8x1xf32>
    %63 = vector.shape_cast %62 : vector<8x1xf32> to vector<1x8x1xf32>
    %64 = vector.broadcast %61 : vector<2x1x128xf32> to vector<2x8x128xf32>
    %65 = vector.broadcast %63 : vector<1x8x1xf32> to vector<2x8x128xf32>
    %66 = arith.mulf %64, %65 : vector<2x8x128xf32>
    %67 = arith.addf %56, %66 : vector<2x8x128xf32>
    %c6_i32 = arith.constant 6 : i32
    %68 = vector.broadcast %c6_i32 : i32 to vector<2x128xi32>
    %69 = arith.cmpi slt, %3, %68 : vector<2x128xi32>
    %70 = arith.select %69, %1, %0 : vector<2x128xi1>, vector<2x128xf32>
    %c122_i32 = arith.constant 122 : i32
    %71 = tpu.dynamic_rotate %70 by %c122_i32 dim 1 : vector<2x128xf32>, i32 -> vector<2x128xf32>
    %72 = vector.shape_cast %71 : vector<2x128xf32> to vector<2x1x128xf32>
    %73 = vector.extract_strided_slice %2 {offsets = [0, 6], sizes = [8, 1], strides = [1, 1]} : vector<8x16xf32> to vector<8x1xf32>
    %74 = vector.shape_cast %73 : vector<8x1xf32> to vector<1x8x1xf32>
    %75 = vector.broadcast %72 : vector<2x1x128xf32> to vector<2x8x128xf32>
    %76 = vector.broadcast %74 : vector<1x8x1xf32> to vector<2x8x128xf32>
    %77 = arith.mulf %75, %76 : vector<2x8x128xf32>
    %78 = arith.addf %67, %77 : vector<2x8x128xf32>
    %c7_i32 = arith.constant 7 : i32
    %79 = vector.broadcast %c7_i32 : i32 to vector<2x128xi32>
    %80 = arith.cmpi slt, %3, %79 : vector<2x128xi32>
    %81 = arith.select %80, %1, %0 : vector<2x128xi1>, vector<2x128xf32>
    %c121_i32 = arith.constant 121 : i32
    %82 = tpu.dynamic_rotate %81 by %c121_i32 dim 1 : vector<2x128xf32>, i32 -> vector<2x128xf32>
    %83 = vector.shape_cast %82 : vector<2x128xf32> to vector<2x1x128xf32>
    %84 = vector.extract_strided_slice %2 {offsets = [0, 7], sizes = [8, 1], strides = [1, 1]} : vector<8x16xf32> to vector<8x1xf32>
    %85 = vector.shape_cast %84 : vector<8x1xf32> to vector<1x8x1xf32>
    %86 = vector.broadcast %83 : vector<2x1x128xf32> to vector<2x8x128xf32>
    %87 = vector.broadcast %85 : vector<1x8x1xf32> to vector<2x8x128xf32>
    %88 = arith.mulf %86, %87 : vector<2x8x128xf32>
    %89 = arith.addf %78, %88 : vector<2x8x128xf32>
    %c8_i32 = arith.constant 8 : i32
    %90 = vector.broadcast %c8_i32 : i32 to vector<2x128xi32>
    %91 = arith.cmpi slt, %3, %90 : vector<2x128xi32>
    %92 = arith.select %91, %1, %0 : vector<2x128xi1>, vector<2x128xf32>
    %c120_i32 = arith.constant 120 : i32
    %93 = tpu.dynamic_rotate %92 by %c120_i32 dim 1 : vector<2x128xf32>, i32 -> vector<2x128xf32>
    %94 = vector.shape_cast %93 : vector<2x128xf32> to vector<2x1x128xf32>
    %95 = vector.extract_strided_slice %2 {offsets = [0, 8], sizes = [8, 1], strides = [1, 1]} : vector<8x16xf32> to vector<8x1xf32>
    %96 = vector.shape_cast %95 : vector<8x1xf32> to vector<1x8x1xf32>
    %97 = vector.broadcast %94 : vector<2x1x128xf32> to vector<2x8x128xf32>
    %98 = vector.broadcast %96 : vector<1x8x1xf32> to vector<2x8x128xf32>
    %99 = arith.mulf %97, %98 : vector<2x8x128xf32>
    %100 = arith.addf %89, %99 : vector<2x8x128xf32>
    %c9_i32 = arith.constant 9 : i32
    %101 = vector.broadcast %c9_i32 : i32 to vector<2x128xi32>
    %102 = arith.cmpi slt, %3, %101 : vector<2x128xi32>
    %103 = arith.select %102, %1, %0 : vector<2x128xi1>, vector<2x128xf32>
    %c119_i32 = arith.constant 119 : i32
    %104 = tpu.dynamic_rotate %103 by %c119_i32 dim 1 : vector<2x128xf32>, i32 -> vector<2x128xf32>
    %105 = vector.shape_cast %104 : vector<2x128xf32> to vector<2x1x128xf32>
    %106 = vector.extract_strided_slice %2 {offsets = [0, 9], sizes = [8, 1], strides = [1, 1]} : vector<8x16xf32> to vector<8x1xf32>
    %107 = vector.shape_cast %106 : vector<8x1xf32> to vector<1x8x1xf32>
    %108 = vector.broadcast %105 : vector<2x1x128xf32> to vector<2x8x128xf32>
    %109 = vector.broadcast %107 : vector<1x8x1xf32> to vector<2x8x128xf32>
    %110 = arith.mulf %108, %109 : vector<2x8x128xf32>
    %111 = arith.addf %100, %110 : vector<2x8x128xf32>
    %c10_i32 = arith.constant 10 : i32
    %112 = vector.broadcast %c10_i32 : i32 to vector<2x128xi32>
    %113 = arith.cmpi slt, %3, %112 : vector<2x128xi32>
    %114 = arith.select %113, %1, %0 : vector<2x128xi1>, vector<2x128xf32>
    %c118_i32 = arith.constant 118 : i32
    %115 = tpu.dynamic_rotate %114 by %c118_i32 dim 1 : vector<2x128xf32>, i32 -> vector<2x128xf32>
    %116 = vector.shape_cast %115 : vector<2x128xf32> to vector<2x1x128xf32>
    %117 = vector.extract_strided_slice %2 {offsets = [0, 10], sizes = [8, 1], strides = [1, 1]} : vector<8x16xf32> to vector<8x1xf32>
    %118 = vector.shape_cast %117 : vector<8x1xf32> to vector<1x8x1xf32>
    %119 = vector.broadcast %116 : vector<2x1x128xf32> to vector<2x8x128xf32>
    %120 = vector.broadcast %118 : vector<1x8x1xf32> to vector<2x8x128xf32>
    %121 = arith.mulf %119, %120 : vector<2x8x128xf32>
    %122 = arith.addf %111, %121 : vector<2x8x128xf32>
    %c11_i32 = arith.constant 11 : i32
    %123 = vector.broadcast %c11_i32 : i32 to vector<2x128xi32>
    %124 = arith.cmpi slt, %3, %123 : vector<2x128xi32>
    %125 = arith.select %124, %1, %0 : vector<2x128xi1>, vector<2x128xf32>
    %c117_i32 = arith.constant 117 : i32
    %126 = tpu.dynamic_rotate %125 by %c117_i32 dim 1 : vector<2x128xf32>, i32 -> vector<2x128xf32>
    %127 = vector.shape_cast %126 : vector<2x128xf32> to vector<2x1x128xf32>
    %128 = vector.extract_strided_slice %2 {offsets = [0, 11], sizes = [8, 1], strides = [1, 1]} : vector<8x16xf32> to vector<8x1xf32>
    %129 = vector.shape_cast %128 : vector<8x1xf32> to vector<1x8x1xf32>
    %130 = vector.broadcast %127 : vector<2x1x128xf32> to vector<2x8x128xf32>
    %131 = vector.broadcast %129 : vector<1x8x1xf32> to vector<2x8x128xf32>
    %132 = arith.mulf %130, %131 : vector<2x8x128xf32>
    %133 = arith.addf %122, %132 : vector<2x8x128xf32>
    %c12_i32 = arith.constant 12 : i32
    %134 = vector.broadcast %c12_i32 : i32 to vector<2x128xi32>
    %135 = arith.cmpi slt, %3, %134 : vector<2x128xi32>
    %136 = arith.select %135, %1, %0 : vector<2x128xi1>, vector<2x128xf32>
    %c116_i32 = arith.constant 116 : i32
    %137 = tpu.dynamic_rotate %136 by %c116_i32 dim 1 : vector<2x128xf32>, i32 -> vector<2x128xf32>
    %138 = vector.shape_cast %137 : vector<2x128xf32> to vector<2x1x128xf32>
    %139 = vector.extract_strided_slice %2 {offsets = [0, 12], sizes = [8, 1], strides = [1, 1]} : vector<8x16xf32> to vector<8x1xf32>
    %140 = vector.shape_cast %139 : vector<8x1xf32> to vector<1x8x1xf32>
    %141 = vector.broadcast %138 : vector<2x1x128xf32> to vector<2x8x128xf32>
    %142 = vector.broadcast %140 : vector<1x8x1xf32> to vector<2x8x128xf32>
    %143 = arith.mulf %141, %142 : vector<2x8x128xf32>
    %144 = arith.addf %133, %143 : vector<2x8x128xf32>
    %c13_i32 = arith.constant 13 : i32
    %145 = vector.broadcast %c13_i32 : i32 to vector<2x128xi32>
    %146 = arith.cmpi slt, %3, %145 : vector<2x128xi32>
    %147 = arith.select %146, %1, %0 : vector<2x128xi1>, vector<2x128xf32>
    %c115_i32 = arith.constant 115 : i32
    %148 = tpu.dynamic_rotate %147 by %c115_i32 dim 1 : vector<2x128xf32>, i32 -> vector<2x128xf32>
    %149 = vector.shape_cast %148 : vector<2x128xf32> to vector<2x1x128xf32>
    %150 = vector.extract_strided_slice %2 {offsets = [0, 13], sizes = [8, 1], strides = [1, 1]} : vector<8x16xf32> to vector<8x1xf32>
    %151 = vector.shape_cast %150 : vector<8x1xf32> to vector<1x8x1xf32>
    %152 = vector.broadcast %149 : vector<2x1x128xf32> to vector<2x8x128xf32>
    %153 = vector.broadcast %151 : vector<1x8x1xf32> to vector<2x8x128xf32>
    %154 = arith.mulf %152, %153 : vector<2x8x128xf32>
    %155 = arith.addf %144, %154 : vector<2x8x128xf32>
    %c14_i32 = arith.constant 14 : i32
    %156 = vector.broadcast %c14_i32 : i32 to vector<2x128xi32>
    %157 = arith.cmpi slt, %3, %156 : vector<2x128xi32>
    %158 = arith.select %157, %1, %0 : vector<2x128xi1>, vector<2x128xf32>
    %c114_i32 = arith.constant 114 : i32
    %159 = tpu.dynamic_rotate %158 by %c114_i32 dim 1 : vector<2x128xf32>, i32 -> vector<2x128xf32>
    %160 = vector.shape_cast %159 : vector<2x128xf32> to vector<2x1x128xf32>
    %161 = vector.extract_strided_slice %2 {offsets = [0, 14], sizes = [8, 1], strides = [1, 1]} : vector<8x16xf32> to vector<8x1xf32>
    %162 = vector.shape_cast %161 : vector<8x1xf32> to vector<1x8x1xf32>
    %163 = vector.broadcast %160 : vector<2x1x128xf32> to vector<2x8x128xf32>
    %164 = vector.broadcast %162 : vector<1x8x1xf32> to vector<2x8x128xf32>
    %165 = arith.mulf %163, %164 : vector<2x8x128xf32>
    %166 = arith.addf %155, %165 : vector<2x8x128xf32>
    %c15_i32 = arith.constant 15 : i32
    %167 = vector.broadcast %c15_i32 : i32 to vector<2x128xi32>
    %168 = arith.cmpi slt, %3, %167 : vector<2x128xi32>
    %169 = arith.select %168, %1, %0 : vector<2x128xi1>, vector<2x128xf32>
    %c113_i32 = arith.constant 113 : i32
    %170 = tpu.dynamic_rotate %169 by %c113_i32 dim 1 : vector<2x128xf32>, i32 -> vector<2x128xf32>
    %171 = vector.shape_cast %170 : vector<2x128xf32> to vector<2x1x128xf32>
    %172 = vector.extract_strided_slice %2 {offsets = [0, 15], sizes = [8, 1], strides = [1, 1]} : vector<8x16xf32> to vector<8x1xf32>
    %173 = vector.shape_cast %172 : vector<8x1xf32> to vector<1x8x1xf32>
    %174 = vector.broadcast %171 : vector<2x1x128xf32> to vector<2x8x128xf32>
    %175 = vector.broadcast %173 : vector<1x8x1xf32> to vector<2x8x128xf32>
    %176 = arith.mulf %174, %175 : vector<2x8x128xf32>
    %177 = arith.addf %166, %176 : vector<2x8x128xf32>
    %c0_5 = arith.constant 0 : index
    %c0_6 = arith.constant 0 : index
    %c0_7 = arith.constant 0 : index
    %178 = vector.load %arg4[%c0_5, %c0_6, %c0_7] : memref<2x8x128xf32, #tpu.memory_space<vmem>>, vector<2x8x128xf32>
    %c0_8 = arith.constant 0 : index
    %c0_9 = arith.constant 0 : index
    %c0_10 = arith.constant 0 : index
    %179 = vector.load %arg3[%c0_8, %c0_9, %c0_10] : memref<2x8x16xf32, #tpu.memory_space<vmem>>, vector<2x8x16xf32>
    %cst_11 = arith.constant 0.000000e+00 : f32
    %180 = vector.broadcast %cst_11 : f32 to vector<2x8x128xf32>
    %c113_i32_12 = arith.constant 113 : i32
    %181 = vector.broadcast %c113_i32_12 : i32 to vector<2x8x128xi32>
    %182 = arith.cmpi sge, %4, %181 : vector<2x8x128xi32>
    %183 = arith.select %182, %178, %177 : vector<2x8x128xi1>, vector<2x8x128xf32>
    %c15_i32_13 = arith.constant 15 : i32
    %184 = tpu.dynamic_rotate %183 by %c15_i32_13 dim 2 : vector<2x8x128xf32>, i32 -> vector<2x8x128xf32>
    %185 = vector.extract_strided_slice %179 {offsets = [0, 0, 0], sizes = [2, 8, 1], strides = [1, 1, 1]} : vector<2x8x16xf32> to vector<2x8x1xf32>
    %186 = vector.broadcast %185 : vector<2x8x1xf32> to vector<2x8x128xf32>
    %187 = arith.mulf %184, %186 : vector<2x8x128xf32>
    %188 = arith.addf %180, %187 : vector<2x8x128xf32>
    %c114_i32_14 = arith.constant 114 : i32
    %189 = vector.broadcast %c114_i32_14 : i32 to vector<2x8x128xi32>
    %190 = arith.cmpi sge, %4, %189 : vector<2x8x128xi32>
    %191 = arith.select %190, %178, %177 : vector<2x8x128xi1>, vector<2x8x128xf32>
    %c14_i32_15 = arith.constant 14 : i32
    %192 = tpu.dynamic_rotate %191 by %c14_i32_15 dim 2 : vector<2x8x128xf32>, i32 -> vector<2x8x128xf32>
    %193 = vector.extract_strided_slice %179 {offsets = [0, 0, 1], sizes = [2, 8, 1], strides = [1, 1, 1]} : vector<2x8x16xf32> to vector<2x8x1xf32>
    %194 = vector.broadcast %193 : vector<2x8x1xf32> to vector<2x8x128xf32>
    %195 = arith.mulf %192, %194 : vector<2x8x128xf32>
    %196 = arith.addf %188, %195 : vector<2x8x128xf32>
    %c115_i32_16 = arith.constant 115 : i32
    %197 = vector.broadcast %c115_i32_16 : i32 to vector<2x8x128xi32>
    %198 = arith.cmpi sge, %4, %197 : vector<2x8x128xi32>
    %199 = arith.select %198, %178, %177 : vector<2x8x128xi1>, vector<2x8x128xf32>
    %c13_i32_17 = arith.constant 13 : i32
    %200 = tpu.dynamic_rotate %199 by %c13_i32_17 dim 2 : vector<2x8x128xf32>, i32 -> vector<2x8x128xf32>
    %201 = vector.extract_strided_slice %179 {offsets = [0, 0, 2], sizes = [2, 8, 1], strides = [1, 1, 1]} : vector<2x8x16xf32> to vector<2x8x1xf32>
    %202 = vector.broadcast %201 : vector<2x8x1xf32> to vector<2x8x128xf32>
    %203 = arith.mulf %200, %202 : vector<2x8x128xf32>
    %204 = arith.addf %196, %203 : vector<2x8x128xf32>
    %c116_i32_18 = arith.constant 116 : i32
    %205 = vector.broadcast %c116_i32_18 : i32 to vector<2x8x128xi32>
    %206 = arith.cmpi sge, %4, %205 : vector<2x8x128xi32>
    %207 = arith.select %206, %178, %177 : vector<2x8x128xi1>, vector<2x8x128xf32>
    %c12_i32_19 = arith.constant 12 : i32
    %208 = tpu.dynamic_rotate %207 by %c12_i32_19 dim 2 : vector<2x8x128xf32>, i32 -> vector<2x8x128xf32>
    %209 = vector.extract_strided_slice %179 {offsets = [0, 0, 3], sizes = [2, 8, 1], strides = [1, 1, 1]} : vector<2x8x16xf32> to vector<2x8x1xf32>
    %210 = vector.broadcast %209 : vector<2x8x1xf32> to vector<2x8x128xf32>
    %211 = arith.mulf %208, %210 : vector<2x8x128xf32>
    %212 = arith.addf %204, %211 : vector<2x8x128xf32>
    %c117_i32_20 = arith.constant 117 : i32
    %213 = vector.broadcast %c117_i32_20 : i32 to vector<2x8x128xi32>
    %214 = arith.cmpi sge, %4, %213 : vector<2x8x128xi32>
    %215 = arith.select %214, %178, %177 : vector<2x8x128xi1>, vector<2x8x128xf32>
    %c11_i32_21 = arith.constant 11 : i32
    %216 = tpu.dynamic_rotate %215 by %c11_i32_21 dim 2 : vector<2x8x128xf32>, i32 -> vector<2x8x128xf32>
    %217 = vector.extract_strided_slice %179 {offsets = [0, 0, 4], sizes = [2, 8, 1], strides = [1, 1, 1]} : vector<2x8x16xf32> to vector<2x8x1xf32>
    %218 = vector.broadcast %217 : vector<2x8x1xf32> to vector<2x8x128xf32>
    %219 = arith.mulf %216, %218 : vector<2x8x128xf32>
    %220 = arith.addf %212, %219 : vector<2x8x128xf32>
    %c118_i32_22 = arith.constant 118 : i32
    %221 = vector.broadcast %c118_i32_22 : i32 to vector<2x8x128xi32>
    %222 = arith.cmpi sge, %4, %221 : vector<2x8x128xi32>
    %223 = arith.select %222, %178, %177 : vector<2x8x128xi1>, vector<2x8x128xf32>
    %c10_i32_23 = arith.constant 10 : i32
    %224 = tpu.dynamic_rotate %223 by %c10_i32_23 dim 2 : vector<2x8x128xf32>, i32 -> vector<2x8x128xf32>
    %225 = vector.extract_strided_slice %179 {offsets = [0, 0, 5], sizes = [2, 8, 1], strides = [1, 1, 1]} : vector<2x8x16xf32> to vector<2x8x1xf32>
    %226 = vector.broadcast %225 : vector<2x8x1xf32> to vector<2x8x128xf32>
    %227 = arith.mulf %224, %226 : vector<2x8x128xf32>
    %228 = arith.addf %220, %227 : vector<2x8x128xf32>
    %c119_i32_24 = arith.constant 119 : i32
    %229 = vector.broadcast %c119_i32_24 : i32 to vector<2x8x128xi32>
    %230 = arith.cmpi sge, %4, %229 : vector<2x8x128xi32>
    %231 = arith.select %230, %178, %177 : vector<2x8x128xi1>, vector<2x8x128xf32>
    %c9_i32_25 = arith.constant 9 : i32
    %232 = tpu.dynamic_rotate %231 by %c9_i32_25 dim 2 : vector<2x8x128xf32>, i32 -> vector<2x8x128xf32>
    %233 = vector.extract_strided_slice %179 {offsets = [0, 0, 6], sizes = [2, 8, 1], strides = [1, 1, 1]} : vector<2x8x16xf32> to vector<2x8x1xf32>
    %234 = vector.broadcast %233 : vector<2x8x1xf32> to vector<2x8x128xf32>
    %235 = arith.mulf %232, %234 : vector<2x8x128xf32>
    %236 = arith.addf %228, %235 : vector<2x8x128xf32>
    %c120_i32_26 = arith.constant 120 : i32
    %237 = vector.broadcast %c120_i32_26 : i32 to vector<2x8x128xi32>
    %238 = arith.cmpi sge, %4, %237 : vector<2x8x128xi32>
    %239 = arith.select %238, %178, %177 : vector<2x8x128xi1>, vector<2x8x128xf32>
    %c8_i32_27 = arith.constant 8 : i32
    %240 = tpu.dynamic_rotate %239 by %c8_i32_27 dim 2 : vector<2x8x128xf32>, i32 -> vector<2x8x128xf32>
    %241 = vector.extract_strided_slice %179 {offsets = [0, 0, 7], sizes = [2, 8, 1], strides = [1, 1, 1]} : vector<2x8x16xf32> to vector<2x8x1xf32>
    %242 = vector.broadcast %241 : vector<2x8x1xf32> to vector<2x8x128xf32>
    %243 = arith.mulf %240, %242 : vector<2x8x128xf32>
    %244 = arith.addf %236, %243 : vector<2x8x128xf32>
    %c121_i32_28 = arith.constant 121 : i32
    %245 = vector.broadcast %c121_i32_28 : i32 to vector<2x8x128xi32>
    %246 = arith.cmpi sge, %4, %245 : vector<2x8x128xi32>
    %247 = arith.select %246, %178, %177 : vector<2x8x128xi1>, vector<2x8x128xf32>
    %c7_i32_29 = arith.constant 7 : i32
    %248 = tpu.dynamic_rotate %247 by %c7_i32_29 dim 2 : vector<2x8x128xf32>, i32 -> vector<2x8x128xf32>
    %249 = vector.extract_strided_slice %179 {offsets = [0, 0, 8], sizes = [2, 8, 1], strides = [1, 1, 1]} : vector<2x8x16xf32> to vector<2x8x1xf32>
    %250 = vector.broadcast %249 : vector<2x8x1xf32> to vector<2x8x128xf32>
    %251 = arith.mulf %248, %250 : vector<2x8x128xf32>
    %252 = arith.addf %244, %251 : vector<2x8x128xf32>
    %c122_i32_30 = arith.constant 122 : i32
    %253 = vector.broadcast %c122_i32_30 : i32 to vector<2x8x128xi32>
    %254 = arith.cmpi sge, %4, %253 : vector<2x8x128xi32>
    %255 = arith.select %254, %178, %177 : vector<2x8x128xi1>, vector<2x8x128xf32>
    %c6_i32_31 = arith.constant 6 : i32
    %256 = tpu.dynamic_rotate %255 by %c6_i32_31 dim 2 : vector<2x8x128xf32>, i32 -> vector<2x8x128xf32>
    %257 = vector.extract_strided_slice %179 {offsets = [0, 0, 9], sizes = [2, 8, 1], strides = [1, 1, 1]} : vector<2x8x16xf32> to vector<2x8x1xf32>
    %258 = vector.broadcast %257 : vector<2x8x1xf32> to vector<2x8x128xf32>
    %259 = arith.mulf %256, %258 : vector<2x8x128xf32>
    %260 = arith.addf %252, %259 : vector<2x8x128xf32>
    %c123_i32_32 = arith.constant 123 : i32
    %261 = vector.broadcast %c123_i32_32 : i32 to vector<2x8x128xi32>
    %262 = arith.cmpi sge, %4, %261 : vector<2x8x128xi32>
    %263 = arith.select %262, %178, %177 : vector<2x8x128xi1>, vector<2x8x128xf32>
    %c5_i32_33 = arith.constant 5 : i32
    %264 = tpu.dynamic_rotate %263 by %c5_i32_33 dim 2 : vector<2x8x128xf32>, i32 -> vector<2x8x128xf32>
    %265 = vector.extract_strided_slice %179 {offsets = [0, 0, 10], sizes = [2, 8, 1], strides = [1, 1, 1]} : vector<2x8x16xf32> to vector<2x8x1xf32>
    %266 = vector.broadcast %265 : vector<2x8x1xf32> to vector<2x8x128xf32>
    %267 = arith.mulf %264, %266 : vector<2x8x128xf32>
    %268 = arith.addf %260, %267 : vector<2x8x128xf32>
    %c124_i32_34 = arith.constant 124 : i32
    %269 = vector.broadcast %c124_i32_34 : i32 to vector<2x8x128xi32>
    %270 = arith.cmpi sge, %4, %269 : vector<2x8x128xi32>
    %271 = arith.select %270, %178, %177 : vector<2x8x128xi1>, vector<2x8x128xf32>
    %c4_i32_35 = arith.constant 4 : i32
    %272 = tpu.dynamic_rotate %271 by %c4_i32_35 dim 2 : vector<2x8x128xf32>, i32 -> vector<2x8x128xf32>
    %273 = vector.extract_strided_slice %179 {offsets = [0, 0, 11], sizes = [2, 8, 1], strides = [1, 1, 1]} : vector<2x8x16xf32> to vector<2x8x1xf32>
    %274 = vector.broadcast %273 : vector<2x8x1xf32> to vector<2x8x128xf32>
    %275 = arith.mulf %272, %274 : vector<2x8x128xf32>
    %276 = arith.addf %268, %275 : vector<2x8x128xf32>
    %c125_i32_36 = arith.constant 125 : i32
    %277 = vector.broadcast %c125_i32_36 : i32 to vector<2x8x128xi32>
    %278 = arith.cmpi sge, %4, %277 : vector<2x8x128xi32>
    %279 = arith.select %278, %178, %177 : vector<2x8x128xi1>, vector<2x8x128xf32>
    %c3_i32_37 = arith.constant 3 : i32
    %280 = tpu.dynamic_rotate %279 by %c3_i32_37 dim 2 : vector<2x8x128xf32>, i32 -> vector<2x8x128xf32>
    %281 = vector.extract_strided_slice %179 {offsets = [0, 0, 12], sizes = [2, 8, 1], strides = [1, 1, 1]} : vector<2x8x16xf32> to vector<2x8x1xf32>
    %282 = vector.broadcast %281 : vector<2x8x1xf32> to vector<2x8x128xf32>
    %283 = arith.mulf %280, %282 : vector<2x8x128xf32>
    %284 = arith.addf %276, %283 : vector<2x8x128xf32>
    %c126_i32_38 = arith.constant 126 : i32
    %285 = vector.broadcast %c126_i32_38 : i32 to vector<2x8x128xi32>
    %286 = arith.cmpi sge, %4, %285 : vector<2x8x128xi32>
    %287 = arith.select %286, %178, %177 : vector<2x8x128xi1>, vector<2x8x128xf32>
    %c2_i32_39 = arith.constant 2 : i32
    %288 = tpu.dynamic_rotate %287 by %c2_i32_39 dim 2 : vector<2x8x128xf32>, i32 -> vector<2x8x128xf32>
    %289 = vector.extract_strided_slice %179 {offsets = [0, 0, 13], sizes = [2, 8, 1], strides = [1, 1, 1]} : vector<2x8x16xf32> to vector<2x8x1xf32>
    %290 = vector.broadcast %289 : vector<2x8x1xf32> to vector<2x8x128xf32>
    %291 = arith.mulf %288, %290 : vector<2x8x128xf32>
    %292 = arith.addf %284, %291 : vector<2x8x128xf32>
    %c127_i32_40 = arith.constant 127 : i32
    %293 = vector.broadcast %c127_i32_40 : i32 to vector<2x8x128xi32>
    %294 = arith.cmpi sge, %4, %293 : vector<2x8x128xi32>
    %295 = arith.select %294, %178, %177 : vector<2x8x128xi1>, vector<2x8x128xf32>
    %c1_i32_41 = arith.constant 1 : i32
    %296 = tpu.dynamic_rotate %295 by %c1_i32_41 dim 2 : vector<2x8x128xf32>, i32 -> vector<2x8x128xf32>
    %297 = vector.extract_strided_slice %179 {offsets = [0, 0, 14], sizes = [2, 8, 1], strides = [1, 1, 1]} : vector<2x8x16xf32> to vector<2x8x1xf32>
    %298 = vector.broadcast %297 : vector<2x8x1xf32> to vector<2x8x128xf32>
    %299 = arith.mulf %296, %298 : vector<2x8x128xf32>
    %300 = arith.addf %292, %299 : vector<2x8x128xf32>
    %301 = vector.extract_strided_slice %179 {offsets = [0, 0, 15], sizes = [2, 8, 1], strides = [1, 1, 1]} : vector<2x8x16xf32> to vector<2x8x1xf32>
    %302 = vector.broadcast %301 : vector<2x8x1xf32> to vector<2x8x128xf32>
    %303 = arith.mulf %177, %302 : vector<2x8x128xf32>
    %304 = arith.addf %300, %303 : vector<2x8x128xf32>
    %c0_42 = arith.constant 0 : index
    %c0_43 = arith.constant 0 : index
    %c0_44 = arith.constant 0 : index
    %305 = vector.load %arg15[%c0_42, %c0_43, %c0_44] : memref<2x8x128xf32, #tpu.memory_space<vmem>>, vector<2x8x128xf32>
    tpu.vector_store %arg15[%c0_42, %c0_43, %c0_44], %304 {strides = array<i32>} : memref<2x8x128xf32, #tpu.memory_space<vmem>>, vector<2x8x128xf32>,
    %306 = vector.shape_cast %304 : vector<2x8x128xf32> to vector<16x128xf32>
    %c0_45 = arith.constant 0 : index
    %c0_46 = arith.constant 0 : index
    %307 = vector.load %arg5[%c0_45, %c0_46] : memref<128x256xf32, #tpu.memory_space<vmem>>, vector<128x256xf32>
    %cst_47 = arith.constant dense<0.000000e+00> : vector<16x256xf32>
    %308 = tpu.matmul %306, %307, %cst_47 {dimension_numbers = #tpu.dot_dimension_numbers<[1], [0], [0], [1], [0, 0, 1, 1], [], []>, precision = #tpu.contract_precision<fp32>} : vector<16x128xf32>, vector<128x256xf32>, vector<16x256xf32> -> vector<16x256xf32>
    %309 = vector.extract_strided_slice %308 {offsets = [0, 0], sizes = [16, 128], strides = [1, 1]} : vector<16x256xf32> to vector<16x128xf32>
    %310 = vector.extract_strided_slice %308 {offsets = [0, 128], sizes = [16, 128], strides = [1, 1]} : vector<16x256xf32> to vector<16x128xf32>
    %311 = arith.mulf %309, %309 : vector<16x128xf32>
    %312 = arith.mulf %310, %310 : vector<16x128xf32>
    %313 = arith.addf %311, %312 : vector<16x128xf32>
    %314 = math.sqrt %313 : vector<16x128xf32>
    %315 = vector.shape_cast %314 : vector<16x128xf32> to vector<2x8x128xf32>
    %c0_48 = arith.constant 0 : index
    %c0_49 = arith.constant 0 : index
    %c0_50 = arith.constant 0 : index
    %316 = vector.load %arg6[%c0_48, %c0_49, %c0_50] : memref<1x8x128xf32, #tpu.memory_space<vmem>>, vector<1x8x128xf32>
    %317 = vector.broadcast %316 : vector<1x8x128xf32> to vector<2x8x128xf32>
    %318 = arith.mulf %315, %317 : vector<2x8x128xf32>
    %c0_51 = arith.constant 0 : index
    %c0_52 = arith.constant 0 : index
    %c0_53 = arith.constant 0 : index
    %319 = vector.load %arg7[%c0_51, %c0_52, %c0_53] : memref<1x1x128xf32, #tpu.memory_space<vmem>>, vector<1x1x128xf32>
    %320 = vector.broadcast %319 : vector<1x1x128xf32> to vector<2x8x128xf32>
    %321 = arith.mulf %318, %320 : vector<2x8x128xf32>
    %cst_54 = arith.constant dense<0.000000e+00> : vector<2x8xf32>
    %322 = vector.multi_reduction <add>, %321, %cst_54 [2] : vector<2x8x128xf32> to vector<2x8xf32>
    %323 = vector.shape_cast %322 : vector<2x8xf32> to vector<2x8x1xf32>
    %cst_55 = arith.constant dense<0.000000e+00> : vector<2x8xf32>
    %324 = vector.multi_reduction <add>, %318, %cst_55 [2] : vector<2x8x128xf32> to vector<2x8xf32>
    %325 = vector.shape_cast %324 : vector<2x8xf32> to vector<2x8x1xf32>
    %326 = arith.divf %323, %325 : vector<2x8x1xf32>
    %327 = vector.extract_strided_slice %326 {offsets = [0, 0, 0], sizes = [1, 8, 1], strides = [1, 1, 1]} : vector<2x8x1xf32> to vector<1x8x1xf32>
    %328 = vector.shape_cast %327 : vector<1x8x1xf32> to vector<8x1xf32>
    %329 = vector.extract_strided_slice %326 {offsets = [1, 0, 0], sizes = [1, 8, 1], strides = [1, 1, 1]} : vector<2x8x1xf32> to vector<1x8x1xf32>
    %330 = vector.shape_cast %329 : vector<1x8x1xf32> to vector<8x1xf32>
    %331 = tpu.concatenate %328, %330 in 1 : vector<8x1xf32>, vector<8x1xf32> -> vector<8x2xf32>
    %c0_56 = arith.constant 0 : index
    %c0_57 = arith.constant 0 : index
    %332 = vector.load %arg8[%c0_56, %c0_57] : memref<8x2xf32, #tpu.memory_space<vmem>>, vector<8x2xf32>
    %333 = arith.subf %331, %332 : vector<8x2xf32>
    %334 = math.absf %333 : vector<8x2xf32>
    %cst_58 = arith.constant dense<0.000000e+00> : vector<8xf32>
    %335 = vector.multi_reduction <add>, %334, %cst_58 [1] : vector<8x2xf32> to vector<8xf32>
    %336 = vector.shape_cast %335 : vector<8xf32> to vector<8x1xf32>
    %cst_59 = arith.constant 2.000000e+00 : f32
    %337 = vector.broadcast %cst_59 : f32 to vector<8x1xf32>
    %338 = arith.divf %336, %337 : vector<8x1xf32>
    %339 = vector.broadcast %338 : vector<8x1xf32> to vector<8x2xf32>
    %340 = arith.subf %334, %339 : vector<8x2xf32>
    %341 = arith.mulf %340, %340 : vector<8x2xf32>
    %cst_60 = arith.constant dense<0.000000e+00> : vector<8xf32>
    %342 = vector.multi_reduction <add>, %341, %cst_60 [1] : vector<8x2xf32> to vector<8xf32>
    %343 = vector.shape_cast %342 : vector<8xf32> to vector<8x1xf32>
    %cst_61 = arith.constant 2.000000e+00 : f32
    %344 = vector.broadcast %cst_61 : f32 to vector<8x1xf32>
    %345 = arith.divf %343, %344 : vector<8x1xf32>
    %346 = vector.broadcast %338 : vector<8x1xf32> to vector<8x2xf32>
    %347 = arith.subf %334, %346 : vector<8x2xf32>
    %cst_62 = arith.constant 9.99999974E-6 : f32
    %348 = vector.broadcast %cst_62 : f32 to vector<8x1xf32>
    %349 = arith.addf %345, %348 : vector<8x1xf32>
    %350 = math.rsqrt %349 : vector<8x1xf32>
    %351 = vector.broadcast %350 : vector<8x1xf32> to vector<8x2xf32>
    %352 = arith.mulf %347, %351 : vector<8x2xf32>
    %353 = math.absf %177 : vector<2x8x128xf32>
    %cst_63 = arith.constant dense<0.000000e+00> : vector<2x8xf32>
    %354 = vector.multi_reduction <add>, %353, %cst_63 [2] : vector<2x8x128xf32> to vector<2x8xf32>
    %355 = vector.shape_cast %354 : vector<2x8xf32> to vector<2x8x1xf32>
    %cst_64 = arith.constant 1.280000e+02 : f32
    %356 = vector.broadcast %cst_64 : f32 to vector<2x8x1xf32>
    %357 = arith.divf %355, %356 : vector<2x8x1xf32>
    %358 = vector.extract_strided_slice %357 {offsets = [0, 0, 0], sizes = [1, 8, 1], strides = [1, 1, 1]} : vector<2x8x1xf32> to vector<1x8x1xf32>
    %359 = vector.shape_cast %358 : vector<1x8x1xf32> to vector<8x1xf32>
    %360 = vector.extract_strided_slice %357 {offsets = [1, 0, 0], sizes = [1, 8, 1], strides = [1, 1, 1]} : vector<2x8x1xf32> to vector<1x8x1xf32>
    %361 = vector.shape_cast %360 : vector<1x8x1xf32> to vector<8x1xf32>
    %362 = tpu.concatenate %359, %361 in 1 : vector<8x1xf32>, vector<8x1xf32> -> vector<8x2xf32>
    %c0_65 = arith.constant 0 : index
    %c0_66 = arith.constant 0 : index
    %363 = vector.load %arg9[%c0_65, %c0_66] : memref<8x8xf32, #tpu.memory_space<vmem>>, vector<8x8xf32>
    %cst_67 = arith.constant dense<0.000000e+00> : vector<8x2xf32>
    %364 = tpu.matmul %363, %352, %cst_67 {dimension_numbers = #tpu.dot_dimension_numbers<[1], [0], [0], [1], [0, 0, 1, 1], [], []>} : vector<8x8xf32>, vector<8x2xf32>, vector<8x2xf32> -> vector<8x2xf32>
    %c0_68 = arith.constant 0 : index
    %c0_69 = arith.constant 0 : index
    %365 = vector.load %arg10[%c0_68, %c0_69] : memref<8x1xf32, #tpu.memory_space<vmem>>, vector<8x1xf32>
    %366 = vector.broadcast %365 : vector<8x1xf32> to vector<8x2xf32>
    %367 = arith.addf %364, %366 : vector<8x2xf32>
    %cst_70 = arith.constant 0.000000e+00 : f32
    %368 = vector.broadcast %cst_70 : f32 to vector<8x2xf32>
    %369 = arith.maximumf %367, %368 : vector<8x2xf32>
    %c0_71 = arith.constant 0 : index
    %c0_72 = arith.constant 0 : index
    %370 = vector.load %arg11[%c0_71, %c0_72] : memref<8x8xf32, #tpu.memory_space<vmem>>, vector<8x8xf32>
    %cst_73 = arith.constant dense<0.000000e+00> : vector<8x2xf32>
    %371 = tpu.matmul %370, %369, %cst_73 {dimension_numbers = #tpu.dot_dimension_numbers<[1], [0], [0], [1], [0, 0, 1, 1], [], []>} : vector<8x8xf32>, vector<8x2xf32>, vector<8x2xf32> -> vector<8x2xf32>
    %c0_74 = arith.constant 0 : index
    %c0_75 = arith.constant 0 : index
    %372 = vector.load %arg12[%c0_74, %c0_75] : memref<8x1xf32, #tpu.memory_space<vmem>>, vector<8x1xf32>
    %373 = vector.broadcast %372 : vector<8x1xf32> to vector<8x2xf32>
    %374 = arith.addf %371, %373 : vector<8x2xf32>
    %375 = math.tanh %374 : vector<8x2xf32>
    %cst_76 = arith.constant 1.500000e+00 : f32
    %376 = vector.broadcast %cst_76 : f32 to vector<8x2xf32>
    %377 = arith.mulf %376, %375 : vector<8x2xf32>
    %cst_77 = arith.constant 5.000000e-01 : f32
    %378 = vector.broadcast %cst_77 : f32 to vector<8x2xf32>
    %379 = arith.addf %377, %378 : vector<8x2xf32>
    %c0_78 = arith.constant 0 : index
    %c0_79 = arith.constant 0 : index
    %380 = vector.load %arg13[%c0_78, %c0_79] : memref<8x8xf32, #tpu.memory_space<vmem>>, vector<8x8xf32>
    %cst_80 = arith.constant dense<0.000000e+00> : vector<8x2xf32>
    %381 = tpu.matmul %380, %362, %cst_80 {dimension_numbers = #tpu.dot_dimension_numbers<[1], [0], [0], [1], [0, 0, 1, 1], [], []>} : vector<8x8xf32>, vector<8x2xf32>, vector<8x2xf32> -> vector<8x2xf32>
    %c0_81 = arith.constant 0 : index
    %c0_82 = arith.constant 0 : index
    %382 = vector.load %arg14[%c0_81, %c0_82] : memref<8x1xf32, #tpu.memory_space<vmem>>, vector<8x1xf32>
    %383 = vector.broadcast %382 : vector<8x1xf32> to vector<8x2xf32>
    %384 = arith.addf %381, %383 : vector<8x2xf32>
    %385 = math.tanh %384 : vector<8x2xf32>
    %cst_83 = arith.constant 2.000000e+00 : f32
    %386 = vector.broadcast %cst_83 : f32 to vector<8x2xf32>
    %387 = arith.mulf %386, %385 : vector<8x2xf32>
    %cst_84 = arith.constant 3.000000e+00 : f32
    %388 = vector.broadcast %cst_84 : f32 to vector<8x2xf32>
    %389 = arith.addf %387, %388 : vector<8x2xf32>
    %390 = arith.addf %389, %379 : vector<8x2xf32>
    %c15_i32_85 = arith.constant 15 : i32
    %391 = tpu.dynamic_rotate %177 by %c15_i32_85 dim 2 : vector<2x8x128xf32>, i32 -> vector<2x8x128xf32>
    %392 = vector.extract_strided_slice %390 {offsets = [0, 0], sizes = [8, 1], strides = [1, 1]} : vector<8x2xf32> to vector<8x1xf32>
    %393 = vector.extract_strided_slice %390 {offsets = [0, 1], sizes = [8, 1], strides = [1, 1]} : vector<8x2xf32> to vector<8x1xf32>
    %394 = vector.shape_cast %392 : vector<8x1xf32> to vector<1x8x1xf32>
    %395 = vector.shape_cast %393 : vector<8x1xf32> to vector<1x8x1xf32>
    %396 = tpu.concatenate %394, %395 in 0 : vector<1x8x1xf32>, vector<1x8x1xf32> -> vector<2x8x1xf32>
    %397 = vector.extract_strided_slice %352 {offsets = [0, 0], sizes = [8, 1], strides = [1, 1]} : vector<8x2xf32> to vector<8x1xf32>
    %398 = vector.extract_strided_slice %352 {offsets = [0, 1], sizes = [8, 1], strides = [1, 1]} : vector<8x2xf32> to vector<8x1xf32>
    %399 = vector.shape_cast %397 : vector<8x1xf32> to vector<1x8x1xf32>
    %400 = vector.shape_cast %398 : vector<8x1xf32> to vector<1x8x1xf32>
    %401 = tpu.concatenate %399, %400 in 0 : vector<1x8x1xf32>, vector<1x8x1xf32> -> vector<2x8x1xf32>
    %c15_i32_86 = arith.constant 15 : i32
    %402 = vector.broadcast %c15_i32_86 : i32 to vector<2x8x128xi32>
    %403 = arith.cmpi slt, %4, %402 : vector<2x8x128xi32>
    %cst_87 = arith.constant 0.000000e+00 : f32
    %404 = vector.broadcast %cst_87 : f32 to vector<2x8x128xf32>
    %405 = arith.select %403, %391, %404 : vector<2x8x128xi1>, vector<2x8x128xf32>
    %c15_i32_88 = arith.constant 15 : i32
    %406 = vector.broadcast %c15_i32_88 : i32 to vector<2x8x128xi32>
    %407 = arith.cmpi eq, %4, %406 : vector<2x8x128xi32>
    %408 = vector.shape_cast %396 : vector<2x8x1xf32> to vector<2x8x1xf32>
    %409 = vector.broadcast %408 : vector<2x8x1xf32> to vector<2x8x128xf32>
    %410 = arith.select %407, %409, %405 : vector<2x8x128xi1>, vector<2x8x128xf32>
    %c16_i32 = arith.constant 16 : i32
    %411 = vector.broadcast %c16_i32 : i32 to vector<2x8x128xi32>
    %412 = arith.cmpi eq, %4, %411 : vector<2x8x128xi32>
    %413 = vector.shape_cast %401 : vector<2x8x1xf32> to vector<2x8x1xf32>
    %414 = vector.broadcast %413 : vector<2x8x1xf32> to vector<2x8x128xf32>
    %415 = arith.select %412, %414, %410 : vector<2x8x128xi1>, vector<2x8x128xf32>
    %c0_89 = arith.constant 0 : index
    %c0_90 = arith.constant 0 : index
    %c0_91 = arith.constant 0 : index
    %416 = vector.load %arg16[%c0_89, %c0_90, %c0_91] : memref<2x8x128xf32, #tpu.memory_space<vmem>>, vector<2x8x128xf32>
    tpu.vector_store %arg16[%c0_89, %c0_90, %c0_91], %415 {strides = array<i32>} : memref<2x8x128xf32, #tpu.memory_space<vmem>>, vector<2x8x128xf32>,
    return
  }
}

</mosaic_0001>

<llo_original>
// kernel: filter_network_forward.1
$region0: #{filter_network_forward.1}
  #allocation0 [shape = 'u32[]', space=smem, size = 0x4, offset = 0x4, fixed_abs, tag = 'smem constant byte address 0x4 - core index']
  #allocation1 [shape = 'u32[144,128]{1,0:T(1,128)}', space=vmem, size = 0x12000, scoped, tag = 'internal scratch']
  %s0 = inlined_call_operand.vmem [shape: f32[2,128], index: 0, kind: input, shape index: {}]
  %s1 = inlined_call_operand.vmem [shape: f32[2,128], index: 1, kind: input, shape index: {}]
  %s2 = inlined_call_operand.vmem [shape: f32[8,16], index: 2, kind: input, shape index: {}]
  %s3 = inlined_call_operand.vmem [shape: f32[2,8,16], index: 3, kind: input, shape index: {}]
  %s4 = inlined_call_operand.vmem [shape: f32[2,8,128], index: 4, kind: input, shape index: {}]
  %s5 = inlined_call_operand.hbm [shape: f32[128,256], index: 5, kind: input, shape index: {}]
  %s6 = inlined_call_operand.vmem [shape: f32[1,8,128], index: 6, kind: input, shape index: {}]
  %s7 = inlined_call_operand.vmem [shape: f32[1,1,128], index: 7, kind: input, shape index: {}]
  %s8 = inlined_call_operand.vmem [shape: f32[8,2], index: 8, kind: input, shape index: {}]
  %s9 = inlined_call_operand.vmem [shape: f32[8,8], index: 9, kind: input, shape index: {}]
  %s10 = inlined_call_operand.vmem [shape: f32[8,1], index: 10, kind: input, shape index: {}]
  %s11 = inlined_call_operand.vmem [shape: f32[8,8], index: 11, kind: input, shape index: {}]
  %s12 = inlined_call_operand.vmem [shape: f32[8,1], index: 12, kind: input, shape index: {}]
  %s13 = inlined_call_operand.vmem [shape: f32[8,8], index: 13, kind: input, shape index: {}]
  %s14 = inlined_call_operand.vmem [shape: f32[8,1], index: 14, kind: input, shape index: {}]
  %s15 = inlined_call_operand.hbm [shape: f32[2,8,128], index: 15, kind: output, shape index: {0}]
  %s16 = inlined_call_operand.vmem [shape: f32[2,8,128], index: 16, kind: output, shape index: {1}]
  %17 = xla_tuple %s15, %s16
  %s18 = sld [smem:[#allocation0]]
  $region82: #{filter_network_forward.1} parent=0
    _
  %s20 = ssub.s32 1, %s18
  %s21 = scalar_select 0, %s20, %s18
  $region1: #{filter_network_forward.1} parent=0
    #allocation2 [shape = 'u8[131072]{0}', space=vmem, size = 0x20000, scoped, tag = 'input window, operand 5, single buffered']
    #allocation3 [shape = 's32[1]{0}', space=sflag, size = 0x4, scoped, tag = 'scoped memory for filter_network_forward.1']
    #allocation4 [shape = 's32[1]{0}', space=sflag, size = 0x4, scoped, tag = 'scoped memory for filter_network_forward.1']
    #allocation5 [shape = 'u8[8192]{0}', space=vmem, size = 0x2000, scoped, tag = 'output window, operand 0, single buffered']
    %22 = vsyncpa [#allocation3], 0
    %23 = vsyncpa [#allocation4], 0
    // Predicated region
    $region2: #{filter_network_forward.1} parent=1 // pred_check
      _
    $region3: #{filter_network_forward.1} parent=1 // pred_check_branch
      %25 = sbr.rel (0) target = $region5
    $region4: #{filter_network_forward.1} parent=1 // pred_region
      _
    $region5: #{filter_network_forward.1} parent=1 // pred_fallthru
      _
    // Predicated region
    $region6: #{filter_network_forward.1} parent=1 // pred_check
      _
    $region7: #{filter_network_forward.1} parent=1 // pred_check_branch
      %27 = sbr.rel (0) target = $region9
    $region8: #{filter_network_forward.1} parent=1 // pred_region
      _
    $region9: #{filter_network_forward.1} parent=1 // pred_fallthru
      _
    // Predicated region
    $region10: #{filter_network_forward.1} parent=1 // pred_check
      _
    $region11: #{filter_network_forward.1} parent=1 // pred_check_branch
      %29 = sbr.rel (0) target = $region13
    $region12: #{filter_network_forward.1} parent=1 // pred_region
      _
    $region13: #{filter_network_forward.1} parent=1 // pred_fallthru
      _
    // Predicated region
    $region14: #{filter_network_forward.1} parent=1 // pred_check
      _
    $region15: #{filter_network_forward.1} parent=1 // pred_check_branch
      %31 = sbr.rel (0) target = $region17
    $region16: #{filter_network_forward.1} parent=1 // pred_region
      _
    $region17: #{filter_network_forward.1} parent=1 // pred_fallthru
      _
    // Predicated region
    $region18: #{filter_network_forward.1} parent=1 // pred_check
      _
    $region19: #{filter_network_forward.1} parent=1 // pred_check_branch
      %33 = sbr.rel (0) target = $region21
    $region20: #{filter_network_forward.1} parent=1 // pred_region
      _
    $region21: #{filter_network_forward.1} parent=1 // pred_fallthru
      _
    // Predicated region
    $region22: #{filter_network_forward.1} parent=1 // pred_check
      _
    $region23: #{filter_network_forward.1} parent=1 // pred_check_branch
      %35 = sbr.rel (0) target = $region25
    $region24: #{filter_network_forward.1} parent=1 // pred_region
      %s37 = ssub.s32 4096, 4096
      %38 = vsyncadd [#allocation3], %s37
      %s39 = sshll.u32 [#allocation2], 4
      %s40 = int_to_ptr.vmem [resolvable:$true] %s39
      %45 = dma.hbm_to_vmem [thread:$0]  %s5, 4096, %s40, [#allocation3], 256, 256, 16
    $region25: #{filter_network_forward.1} parent=1 // pred_fallthru
      _
    // Predicated region
    $region26: #{filter_network_forward.1} parent=1 // pred_check
      _
    $region27: #{filter_network_forward.1} parent=1 // pred_check_branch
      %47 = sbr.rel (0) target = $region29
    $region28: #{filter_network_forward.1} parent=1 // pred_region
      _
    $region29: #{filter_network_forward.1} parent=1 // pred_fallthru
      _
    // Predicated region
    $region30: #{filter_network_forward.1} parent=1 // pred_check
      _
    $region31: #{filter_network_forward.1} parent=1 // pred_check_branch
      %49 = sbr.rel (0) target = $region33
    $region32: #{filter_network_forward.1} parent=1 // pred_region
      _
    $region33: #{filter_network_forward.1} parent=1 // pred_fallthru
      _
    // Predicated region
    $region34: #{filter_network_forward.1} parent=1 // pred_check
      _
    $region35: #{filter_network_forward.1} parent=1 // pred_check_branch
      %51 = sbr.rel (0) target = $region37
    $region36: #{filter_network_forward.1} parent=1 // pred_region
      _
    $region37: #{filter_network_forward.1} parent=1 // pred_fallthru
      _
    // Predicated region
    $region38: #{filter_network_forward.1} parent=1 // pred_check
      _
    $region39: #{filter_network_forward.1} parent=1 // pred_check_branch
      %53 = sbr.rel (0) target = $region41
    $region40: #{filter_network_forward.1} parent=1 // pred_region
      _
    $region41: #{filter_network_forward.1} parent=1 // pred_fallthru
      _
    // Predicated region
    $region42: #{filter_network_forward.1} parent=1 // pred_check
      _
    $region43: #{filter_network_forward.1} parent=1 // pred_check_branch
      %55 = sbr.rel (0) target = $region45
    $region44: #{filter_network_forward.1} parent=1 // pred_region
      _
    $region45: #{filter_network_forward.1} parent=1 // pred_fallthru
      _
    // Predicated region
    $region46: #{filter_network_forward.1} parent=1 // pred_check
      _
    $region47: #{filter_network_forward.1} parent=1 // pred_check_branch
      %57 = sbr.rel (0) target = $region49
    $region48: #{filter_network_forward.1} parent=1 // pred_region
      _
    $region49: #{filter_network_forward.1} parent=1 // pred_fallthru
      _
    // Predicated region
    $region50: #{filter_network_forward.1} parent=1 // pred_check
      _
    $region51: #{filter_network_forward.1} parent=1 // pred_check_branch
      %59 = sbr.rel (0) target = $region53
    $region52: #{filter_network_forward.1} parent=1 // pred_region
      _
    $region53: #{filter_network_forward.1} parent=1 // pred_fallthru
      _
    // Predicated region
    $region54: #{filter_network_forward.1} parent=1 // pred_check
      _
    $region55: #{filter_network_forward.1} parent=1 // pred_check_branch
      %61 = sbr.rel (0) target = $region57
    $region56: #{filter_network_forward.1} parent=1 // pred_region
      _
    $region57: #{filter_network_forward.1} parent=1 // pred_fallthru
      _
    // Predicated region
    $region58: #{filter_network_forward.1} parent=1 // pred_check
      _
    $region59: #{filter_network_forward.1} parent=1 // pred_check_branch
      %63 = sbr.rel (0) target = $region61
    $region60: #{filter_network_forward.1} parent=1 // pred_region
      _
    $region61: #{filter_network_forward.1} parent=1 // pred_fallthru
      _
    // Predicated region
    $region62: #{filter_network_forward.1} parent=1 // pred_check
      _
    $region63: #{filter_network_forward.1} parent=1 // pred_check_branch
      %65 = sbr.rel (0) target = $region65
    $region64: #{filter_network_forward.1} parent=1 // pred_region
      %66 = dma.done [#allocation3], 4096
    $region65: #{filter_network_forward.1} parent=1 // pred_fallthru
      _
    %v67 = vld [vmem:[%s0] sm:$0x3]
    %v68 = vld [vmem:[%s1] sm:$0x3]
    %v69 = vld [vmem:[%s2] sm:$0xff]
    %v70 = vlaneseq
    %v71 = vand.u32 %v70, 127
    %v74 = vunpack.c.l.s4 1966171168
    %v75 = vunpack.c.0.s8 %v74
    %v76 = vlaneseq
    %v77 = vshrl.u32 %v76, 7
    %v78 = vsub.s32 %v75, %v77
    %v79 = vrot.slane %v67, %v78
    %v80 = vcombine.high %v79, %v79
    %v82 = vunpack.c.l.s4 1966171168
    %v83 = vunpack.c.0.s8 %v82
    %v84 = vlaneseq
    %v85 = vshrl.u32 %v84, 7
    %v86 = vsub.s32 %v83, %v85
    %v87 = vrot.slane %v79, %v86
    %v89 = vunpack.c.l.s4 1966171168
    %v90 = vunpack.c.0.s8 %v89
    %v91 = vlaneseq
    %v92 = vshrl.u32 %v91, 7
    %v93 = vsub.s32 %v90, %v92
    %v94 = vrot.slane %v80, %v93
    %v95 = vlaneseq
    %v96 = vshrl.u32 %v95, 7
    %v97 = vsub.s32 0, %v96
    %v98 = vrot.slane %v87, %v97
    %v99 = vlaneseq
    %v100 = vshrl.u32 %v99, 7
    %v101 = vsub.s32 0, %v100
    %v102 = vrot.slane %v94, %v101
    %106 = vset.pattern.permute.xlu0 0
    %107 = vperm.xlu0 %106, %v69
    %v108 = vpop.permute.xlu0 %107
    %v110 = vmul.f32 %v98, %v108
    %v111 = vmul.f32 %v102, %v108
    %v112 = vadd.f32 %v110, 0.0
    %v113 = vadd.f32 %v111, 0.0
    %vm114 = vcmp.lt.s32.totalorder %v71, 1
    %v115 = vsel %vm114, %v68, %v67
    %116 = vrot.lane.b32.xlu0 %v115, 127
    %v117 = vpop.permute.xlu0 %116
    %v120 = vunpack.c.l.s4 1966171168
    %v121 = vunpack.c.0.s8 %v120
    %v122 = vlaneseq
    %v123 = vshrl.u32 %v122, 7
    %v124 = vsub.s32 %v121, %v123
    %v125 = vrot.slane %v117, %v124
    %v126 = vcombine.high %v125, %v125
    %v128 = vunpack.c.l.s4 1966171168
    %v129 = vunpack.c.0.s8 %v128
    %v130 = vlaneseq
    %v131 = vshrl.u32 %v130, 7
    %v132 = vsub.s32 %v129, %v131
    %v133 = vrot.slane %v125, %v132
    %v135 = vunpack.c.l.s4 1966171168
    %v136 = vunpack.c.0.s8 %v135
    %v137 = vlaneseq
    %v138 = vshrl.u32 %v137, 7
    %v139 = vsub.s32 %v136, %v138
    %v140 = vrot.slane %v126, %v139
    %v141 = vlaneseq
    %v142 = vshrl.u32 %v141, 7
    %v143 = vsub.s32 0, %v142
    %v144 = vrot.slane %v133, %v143
    %v145 = vlaneseq
    %v146 = vshrl.u32 %v145, 7
    %v147 = vsub.s32 0, %v146
    %v148 = vrot.slane %v140, %v147
    %151 = vset.pattern.permute.xlu0 1
    %152 = vperm.xlu0 %151, %v69
    %v153 = vpop.permute.xlu0 %152
    %v155 = vmul.f32 %v144, %v153
    %v156 = vmul.f32 %v148, %v153
    %v157 = vadd.f32 %v112, %v155
    %v158 = vadd.f32 %v113, %v156
    %vm159 = vcmp.lt.s32.totalorder %v71, 2
    %v160 = vsel %vm159, %v68, %v67
    %161 = vrot.lane.b32.xlu0 %v160, 126
    %v162 = vpop.permute.xlu0 %161
    %v165 = vunpack.c.l.s4 1966171168
    %v166 = vunpack.c.0.s8 %v165
    %v167 = vlaneseq
    %v168 = vshrl.u32 %v167, 7
    %v169 = vsub.s32 %v166, %v168
    %v170 = vrot.slane %v162, %v169
    %v171 = vcombine.high %v170, %v170
    %v173 = vunpack.c.l.s4 1966171168
    %v174 = vunpack.c.0.s8 %v173
    %v175 = vlaneseq
    %v176 = vshrl.u32 %v175, 7
    %v177 = vsub.s32 %v174, %v176
    %v178 = vrot.slane %v170, %v177
    %v180 = vunpack.c.l.s4 1966171168
    %v181 = vunpack.c.0.s8 %v180
    %v182 = vlaneseq
    %v183 = vshrl.u32 %v182, 7
    %v184 = vsub.s32 %v181, %v183
    %v185 = vrot.slane %v171, %v184
    %v186 = vlaneseq
    %v187 = vshrl.u32 %v186, 7
    %v188 = vsub.s32 0, %v187
    %v189 = vrot.slane %v178, %v188
    %v190 = vlaneseq
    %v191 = vshrl.u32 %v190, 7
    %v192 = vsub.s32 0, %v191
    %v193 = vrot.slane %v185, %v192
    %196 = vset.pattern.permute.xlu0 2
    %197 = vperm.xlu0 %196, %v69
    %v198 = vpop.permute.xlu0 %197
    %v200 = vmul.f32 %v189, %v198
    %v201 = vmul.f32 %v193, %v198
    %v202 = vadd.f32 %v157, %v200
    %v203 = vadd.f32 %v158, %v201
    %vm204 = vcmp.lt.s32.totalorder %v71, 3
    %v205 = vsel %vm204, %v68, %v67
    %206 = vrot.lane.b32.xlu0 %v205, 125
    %v207 = vpop.permute.xlu0 %206
    %v210 = vunpack.c.l.s4 1966171168
    %v211 = vunpack.c.0.s8 %v210
    %v212 = vlaneseq
    %v213 = vshrl.u32 %v212, 7
    %v214 = vsub.s32 %v211, %v213
    %v215 = vrot.slane %v207, %v214
    %v216 = vcombine.high %v215, %v215
    %v218 = vunpack.c.l.s4 1966171168
    %v219 = vunpack.c.0.s8 %v218
    %v220 = vlaneseq
    %v221 = vshrl.u32 %v220, 7
    %v222 = vsub.s32 %v219, %v221
    %v223 = vrot.slane %v215, %v222
    %v225 = vunpack.c.l.s4 1966171168
    %v226 = vunpack.c.0.s8 %v225
    %v227 = vlaneseq
    %v228 = vshrl.u32 %v227, 7
    %v229 = vsub.s32 %v226, %v228
    %v230 = vrot.slane %v216, %v229
    %v231 = vlaneseq
    %v232 = vshrl.u32 %v231, 7
    %v233 = vsub.s32 0, %v232
    %v234 = vrot.slane %v223, %v233
    %v235 = vlaneseq
    %v236 = vshrl.u32 %v235, 7
    %v237 = vsub.s32 0, %v236
    %v238 = vrot.slane %v230, %v237
    %241 = vset.pattern.permute.xlu0 3
    %242 = vperm.xlu0 %241, %v69
    %v243 = vpop.permute.xlu0 %242
    %v245 = vmul.f32 %v234, %v243
    %v246 = vmul.f32 %v238, %v243
    %v247 = vadd.f32 %v202, %v245
    %v248 = vadd.f32 %v203, %v246
    %vm249 = vcmp.lt.s32.totalorder %v71, 4
    %v250 = vsel %vm249, %v68, %v67
    %251 = vrot.lane.b32.xlu0 %v250, 124
    %v252 = vpop.permute.xlu0 %251
    %v255 = vunpack.c.l.s4 1966171168
    %v256 = vunpack.c.0.s8 %v255
    %v257 = vlaneseq
    %v258 = vshrl.u32 %v257, 7
    %v259 = vsub.s32 %v256, %v258
    %v260 = vrot.slane %v252, %v259
    %v261 = vcombine.high %v260, %v260
    %v263 = vunpack.c.l.s4 1966171168
    %v264 = vunpack.c.0.s8 %v263
    %v265 = vlaneseq
    %v266 = vshrl.u32 %v265, 7
    %v267 = vsub.s32 %v264, %v266
    %v268 = vrot.slane %v260, %v267
    %v270 = vunpack.c.l.s4 1966171168
    %v271 = vunpack.c.0.s8 %v270
    %v272 = vlaneseq
    %v273 = vshrl.u32 %v272, 7
    %v274 = vsub.s32 %v271, %v273
    %v275 = vrot.slane %v261, %v274
    %v276 = vlaneseq
    %v277 = vshrl.u32 %v276, 7
    %v278 = vsub.s32 0, %v277
    %v279 = vrot.slane %v268, %v278
    %v280 = vlaneseq
    %v281 = vshrl.u32 %v280, 7
    %v282 = vsub.s32 0, %v281
    %v283 = vrot.slane %v275, %v282
    %286 = vset.pattern.permute.xlu0 4
    %287 = vperm.xlu0 %286, %v69
    %v288 = vpop.permute.xlu0 %287
    %v290 = vmul.f32 %v279, %v288
    %v291 = vmul.f32 %v283, %v288
    %v292 = vadd.f32 %v247, %v290
    %v293 = vadd.f32 %v248, %v291
    %vm294 = vcmp.lt.s32.totalorder %v71, 5
    %v295 = vsel %vm294, %v68, %v67
    %296 = vrot.lane.b32.xlu0 %v295, 123
    %v297 = vpop.permute.xlu0 %296
    %v300 = vunpack.c.l.s4 1966171168
    %v301 = vunpack.c.0.s8 %v300
    %v302 = vlaneseq
    %v303 = vshrl.u32 %v302, 7
    %v304 = vsub.s32 %v301, %v303
    %v305 = vrot.slane %v297, %v304
    %v306 = vcombine.high %v305, %v305
    %v308 = vunpack.c.l.s4 1966171168
    %v309 = vunpack.c.0.s8 %v308
    %v310 = vlaneseq
    %v311 = vshrl.u32 %v310, 7
    %v312 = vsub.s32 %v309, %v311
    %v313 = vrot.slane %v305, %v312
    %v315 = vunpack.c.l.s4 1966171168
    %v316 = vunpack.c.0.s8 %v315
    %v317 = vlaneseq
    %v318 = vshrl.u32 %v317, 7
    %v319 = vsub.s32 %v316, %v318
    %v320 = vrot.slane %v306, %v319
    %v321 = vlaneseq
    %v322 = vshrl.u32 %v321, 7
    %v323 = vsub.s32 0, %v322
    %v324 = vrot.slane %v313, %v323
    %v325 = vlaneseq
    %v326 = vshrl.u32 %v325, 7
    %v327 = vsub.s32 0, %v326
    %v328 = vrot.slane %v320, %v327
    %331 = vset.pattern.permute.xlu0 5
    %332 = vperm.xlu0 %331, %v69
    %v333 = vpop.permute.xlu0 %332
    %v335 = vmul.f32 %v324, %v333
    %v336 = vmul.f32 %v328, %v333
    %v337 = vadd.f32 %v292, %v335
    %v338 = vadd.f32 %v293, %v336
    %vm339 = vcmp.lt.s32.totalorder %v71, 6
    %v340 = vsel %vm339, %v68, %v67
    %341 = vrot.lane.b32.xlu0 %v340, 122
    %v342 = vpop.permute.xlu0 %341
    %v345 = vunpack.c.l.s4 1966171168
    %v346 = vunpack.c.0.s8 %v345
    %v347 = vlaneseq
    %v348 = vshrl.u32 %v347, 7
    %v349 = vsub.s32 %v346, %v348
    %v350 = vrot.slane %v342, %v349
    %v351 = vcombine.high %v350, %v350
    %v353 = vunpack.c.l.s4 1966171168
    %v354 = vunpack.c.0.s8 %v353
    %v355 = vlaneseq
    %v356 = vshrl.u32 %v355, 7
    %v357 = vsub.s32 %v354, %v356
    %v358 = vrot.slane %v350, %v357
    %v360 = vunpack.c.l.s4 1966171168
    %v361 = vunpack.c.0.s8 %v360
    %v362 = vlaneseq
    %v363 = vshrl.u32 %v362, 7
    %v364 = vsub.s32 %v361, %v363
    %v365 = vrot.slane %v351, %v364
    %v366 = vlaneseq
    %v367 = vshrl.u32 %v366, 7
    %v368 = vsub.s32 0, %v367
    %v369 = vrot.slane %v358, %v368
    %v370 = vlaneseq
    %v371 = vshrl.u32 %v370, 7
    %v372 = vsub.s32 0, %v371
    %v373 = vrot.slane %v365, %v372
    %376 = vset.pattern.permute.xlu0 6
    %377 = vperm.xlu0 %376, %v69
    %v378 = vpop.permute.xlu0 %377
    %v380 = vmul.f32 %v369, %v378
    %v381 = vmul.f32 %v373, %v378
    %v382 = vadd.f32 %v337, %v380
    %v383 = vadd.f32 %v338, %v381
    %vm384 = vcmp.lt.s32.totalorder %v71, 7
    %v385 = vsel %vm384, %v68, %v67
    %386 = vrot.lane.b32.xlu0 %v385, 121
    %v387 = vpop.permute.xlu0 %386
    %v390 = vunpack.c.l.s4 1966171168
    %v391 = vunpack.c.0.s8 %v390
    %v392 = vlaneseq
    %v393 = vshrl.u32 %v392, 7
    %v394 = vsub.s32 %v391, %v393
    %v395 = vrot.slane %v387, %v394
    %v396 = vcombine.high %v395, %v395
    %v398 = vunpack.c.l.s4 1966171168
    %v399 = vunpack.c.0.s8 %v398
    %v400 = vlaneseq
    %v401 = vshrl.u32 %v400, 7
    %v402 = vsub.s32 %v399, %v401
    %v403 = vrot.slane %v395, %v402
    %v405 = vunpack.c.l.s4 1966171168
    %v406 = vunpack.c.0.s8 %v405
    %v407 = vlaneseq
    %v408 = vshrl.u32 %v407, 7
    %v409 = vsub.s32 %v406, %v408
    %v410 = vrot.slane %v396, %v409
    %v411 = vlaneseq
    %v412 = vshrl.u32 %v411, 7
    %v413 = vsub.s32 0, %v412
    %v414 = vrot.slane %v403, %v413
    %v415 = vlaneseq
    %v416 = vshrl.u32 %v415, 7
    %v417 = vsub.s32 0, %v416
    %v418 = vrot.slane %v410, %v417
    %421 = vset.pattern.permute.xlu0 7
    %422 = vperm.xlu0 %421, %v69
    %v423 = vpop.permute.xlu0 %422
    %v425 = vmul.f32 %v414, %v423
    %v426 = vmul.f32 %v418, %v423
    %v427 = vadd.f32 %v382, %v425
    %v428 = vadd.f32 %v383, %v426
    %vm429 = vcmp.lt.s32.totalorder %v71, 8
    %v430 = vsel %vm429, %v68, %v67
    %431 = vrot.lane.b32.xlu0 %v430, 120
    %v432 = vpop.permute.xlu0 %431
    %v435 = vunpack.c.l.s4 1966171168
    %v436 = vunpack.c.0.s8 %v435
    %v437 = vlaneseq
    %v438 = vshrl.u32 %v437, 7
    %v439 = vsub.s32 %v436, %v438
    %v440 = vrot.slane %v432, %v439
    %v441 = vcombine.high %v440, %v440
    %v443 = vunpack.c.l.s4 1966171168
    %v444 = vunpack.c.0.s8 %v443
    %v445 = vlaneseq
    %v446 = vshrl.u32 %v445, 7
    %v447 = vsub.s32 %v444, %v446
    %v448 = vrot.slane %v440, %v447
    %v450 = vunpack.c.l.s4 1966171168
    %v451 = vunpack.c.0.s8 %v450
    %v452 = vlaneseq
    %v453 = vshrl.u32 %v452, 7
    %v454 = vsub.s32 %v451, %v453
    %v455 = vrot.slane %v441, %v454
    %v456 = vlaneseq
    %v457 = vshrl.u32 %v456, 7
    %v458 = vsub.s32 0, %v457
    %v459 = vrot.slane %v448, %v458
    %v460 = vlaneseq
    %v461 = vshrl.u32 %v460, 7
    %v462 = vsub.s32 0, %v461
    %v463 = vrot.slane %v455, %v462
    %466 = vset.pattern.permute.xlu0 8
    %467 = vperm.xlu0 %466, %v69
    %v468 = vpop.permute.xlu0 %467
    %v470 = vmul.f32 %v459, %v468
    %v471 = vmul.f32 %v463, %v468
    %v472 = vadd.f32 %v427, %v470
    %v473 = vadd.f32 %v428, %v471
    %vm474 = vcmp.lt.s32.totalorder %v71, 9
    %v475 = vsel %vm474, %v68, %v67
    %476 = vrot.lane.b32.xlu0 %v475, 119
    %v477 = vpop.permute.xlu0 %476
    %v480 = vunpack.c.l.s4 1966171168
    %v481 = vunpack.c.0.s8 %v480
    %v482 = vlaneseq
    %v483 = vshrl.u32 %v482, 7
    %v484 = vsub.s32 %v481, %v483
    %v485 = vrot.slane %v477, %v484
    %v486 = vcombine.high %v485, %v485
    %v488 = vunpack.c.l.s4 1966171168
    %v489 = vunpack.c.0.s8 %v488
    %v490 = vlaneseq
    %v491 = vshrl.u32 %v490, 7
    %v492 = vsub.s32 %v489, %v491
    %v493 = vrot.slane %v485, %v492
    %v495 = vunpack.c.l.s4 1966171168
    %v496 = vunpack.c.0.s8 %v495
    %v497 = vlaneseq
    %v498 = vshrl.u32 %v497, 7
    %v499 = vsub.s32 %v496, %v498
    %v500 = vrot.slane %v486, %v499
    %v501 = vlaneseq
    %v502 = vshrl.u32 %v501, 7
    %v503 = vsub.s32 0, %v502
    %v504 = vrot.slane %v493, %v503
    %v505 = vlaneseq
    %v506 = vshrl.u32 %v505, 7
    %v507 = vsub.s32 0, %v506
    %v508 = vrot.slane %v500, %v507
    %511 = vset.pattern.permute.xlu0 9
    %512 = vperm.xlu0 %511, %v69
    %v513 = vpop.permute.xlu0 %512
    %v515 = vmul.f32 %v504, %v513
    %v516 = vmul.f32 %v508, %v513
    %v517 = vadd.f32 %v472, %v515
    %v518 = vadd.f32 %v473, %v516
    %vm519 = vcmp.lt.s32.totalorder %v71, 10
    %v520 = vsel %vm519, %v68, %v67
    %521 = vrot.lane.b32.xlu0 %v520, 118
    %v522 = vpop.permute.xlu0 %521
    %v525 = vunpack.c.l.s4 1966171168
    %v526 = vunpack.c.0.s8 %v525
    %v527 = vlaneseq
    %v528 = vshrl.u32 %v527, 7
    %v529 = vsub.s32 %v526, %v528
    %v530 = vrot.slane %v522, %v529
    %v531 = vcombine.high %v530, %v530
    %v533 = vunpack.c.l.s4 1966171168
    %v534 = vunpack.c.0.s8 %v533
    %v535 = vlaneseq
    %v536 = vshrl.u32 %v535, 7
    %v537 = vsub.s32 %v534, %v536
    %v538 = vrot.slane %v530, %v537
    %v540 = vunpack.c.l.s4 1966171168
    %v541 = vunpack.c.0.s8 %v540
    %v542 = vlaneseq
    %v543 = vshrl.u32 %v542, 7
    %v544 = vsub.s32 %v541, %v543
    %v545 = vrot.slane %v531, %v544
    %v546 = vlaneseq
    %v547 = vshrl.u32 %v546, 7
    %v548 = vsub.s32 0, %v547
    %v549 = vrot.slane %v538, %v548
    %v550 = vlaneseq
    %v551 = vshrl.u32 %v550, 7
    %v552 = vsub.s32 0, %v551
    %v553 = vrot.slane %v545, %v552
    %556 = vset.pattern.permute.xlu0 10
    %557 = vperm.xlu0 %556, %v69
    %v558 = vpop.permute.xlu0 %557
    %v560 = vmul.f32 %v549, %v558
    %v561 = vmul.f32 %v553, %v558
    %v562 = vadd.f32 %v517, %v560
    %v563 = vadd.f32 %v518, %v561
    %vm564 = vcmp.lt.s32.totalorder %v71, 11
    %v565 = vsel %vm564, %v68, %v67
    %566 = vrot.lane.b32.xlu0 %v565, 117
    %v567 = vpop.permute.xlu0 %566
    %v570 = vunpack.c.l.s4 1966171168
    %v571 = vunpack.c.0.s8 %v570
    %v572 = vlaneseq
    %v573 = vshrl.u32 %v572, 7
    %v574 = vsub.s32 %v571, %v573
    %v575 = vrot.slane %v567, %v574
    %v576 = vcombine.high %v575, %v575
    %v578 = vunpack.c.l.s4 1966171168
    %v579 = vunpack.c.0.s8 %v578
    %v580 = vlaneseq
    %v581 = vshrl.u32 %v580, 7
    %v582 = vsub.s32 %v579, %v581
    %v583 = vrot.slane %v575, %v582
    %v585 = vunpack.c.l.s4 1966171168
    %v586 = vunpack.c.0.s8 %v585
    %v587 = vlaneseq
    %v588 = vshrl.u32 %v587, 7
    %v589 = vsub.s32 %v586, %v588
    %v590 = vrot.slane %v576, %v589
    %v591 = vlaneseq
    %v592 = vshrl.u32 %v591, 7
    %v593 = vsub.s32 0, %v592
    %v594 = vrot.slane %v583, %v593
    %v595 = vlaneseq
    %v596 = vshrl.u32 %v595, 7
    %v597 = vsub.s32 0, %v596
    %v598 = vrot.slane %v590, %v597
    %601 = vset.pattern.permute.xlu0 11
    %602 = vperm.xlu0 %601, %v69
    %v603 = vpop.permute.xlu0 %602
    %v605 = vmul.f32 %v594, %v603
    %v606 = vmul.f32 %v598, %v603
    %v607 = vadd.f32 %v562, %v605
    %v608 = vadd.f32 %v563, %v606
    %vm609 = vcmp.lt.s32.totalorder %v71, 12
    %v610 = vsel %vm609, %v68, %v67
    %611 = vrot.lane.b32.xlu0 %v610, 116
    %v612 = vpop.permute.xlu0 %611
    %v615 = vunpack.c.l.s4 1966171168
    %v616 = vunpack.c.0.s8 %v615
    %v617 = vlaneseq
    %v618 = vshrl.u32 %v617, 7
    %v619 = vsub.s32 %v616, %v618
    %v620 = vrot.slane %v612, %v619
    %v621 = vcombine.high %v620, %v620
    %v623 = vunpack.c.l.s4 1966171168
    %v624 = vunpack.c.0.s8 %v623
    %v625 = vlaneseq
    %v626 = vshrl.u32 %v625, 7
    %v627 = vsub.s32 %v624, %v626
    %v628 = vrot.slane %v620, %v627
    %v630 = vunpack.c.l.s4 1966171168
    %v631 = vunpack.c.0.s8 %v630
    %v632 = vlaneseq
    %v633 = vshrl.u32 %v632, 7
    %v634 = vsub.s32 %v631, %v633
    %v635 = vrot.slane %v621, %v634
    %v636 = vlaneseq
    %v637 = vshrl.u32 %v636, 7
    %v638 = vsub.s32 0, %v637
    %v639 = vrot.slane %v628, %v638
    %v640 = vlaneseq
    %v641 = vshrl.u32 %v640, 7
    %v642 = vsub.s32 0, %v641
    %v643 = vrot.slane %v635, %v642
    %646 = vset.pattern.permute.xlu0 12
    %647 = vperm.xlu0 %646, %v69
    %v648 = vpop.permute.xlu0 %647
    %v650 = vmul.f32 %v639, %v648
    %v651 = vmul.f32 %v643, %v648
    %v652 = vadd.f32 %v607, %v650
    %v653 = vadd.f32 %v608, %v651
    %vm654 = vcmp.lt.s32.totalorder %v71, 13
    %v655 = vsel %vm654, %v68, %v67
    %656 = vrot.lane.b32.xlu0 %v655, 115
    %v657 = vpop.permute.xlu0 %656
    %v660 = vunpack.c.l.s4 1966171168
    %v661 = vunpack.c.0.s8 %v660
    %v662 = vlaneseq
    %v663 = vshrl.u32 %v662, 7
    %v664 = vsub.s32 %v661, %v663
    %v665 = vrot.slane %v657, %v664
    %v666 = vcombine.high %v665, %v665
    %v668 = vunpack.c.l.s4 1966171168
    %v669 = vunpack.c.0.s8 %v668
    %v670 = vlaneseq
    %v671 = vshrl.u32 %v670, 7
    %v672 = vsub.s32 %v669, %v671
    %v673 = vrot.slane %v665, %v672
    %v675 = vunpack.c.l.s4 1966171168
    %v676 = vunpack.c.0.s8 %v675
    %v677 = vlaneseq
    %v678 = vshrl.u32 %v677, 7
    %v679 = vsub.s32 %v676, %v678
    %v680 = vrot.slane %v666, %v679
    %v681 = vlaneseq
    %v682 = vshrl.u32 %v681, 7
    %v683 = vsub.s32 0, %v682
    %v684 = vrot.slane %v673, %v683
    %v685 = vlaneseq
    %v686 = vshrl.u32 %v685, 7
    %v687 = vsub.s32 0, %v686
    %v688 = vrot.slane %v680, %v687
    %691 = vset.pattern.permute.xlu0 13
    %692 = vperm.xlu0 %691, %v69
    %v693 = vpop.permute.xlu0 %692
    %v695 = vmul.f32 %v684, %v693
    %v696 = vmul.f32 %v688, %v693
    %v697 = vadd.f32 %v652, %v695
    %v698 = vadd.f32 %v653, %v696
    %vm699 = vcmp.lt.s32.totalorder %v71, 14
    %v700 = vsel %vm699, %v68, %v67
    %701 = vrot.lane.b32.xlu0 %v700, 114
    %v702 = vpop.permute.xlu0 %701
    %v705 = vunpack.c.l.s4 1966171168
    %v706 = vunpack.c.0.s8 %v705
    %v707 = vlaneseq
    %v708 = vshrl.u32 %v707, 7
    %v709 = vsub.s32 %v706, %v708
    %v710 = vrot.slane %v702, %v709
    %v711 = vcombine.high %v710, %v710
    %v713 = vunpack.c.l.s4 1966171168
    %v714 = vunpack.c.0.s8 %v713
    %v715 = vlaneseq
    %v716 = vshrl.u32 %v715, 7
    %v717 = vsub.s32 %v714, %v716
    %v718 = vrot.slane %v710, %v717
    %v720 = vunpack.c.l.s4 1966171168
    %v721 = vunpack.c.0.s8 %v720
    %v722 = vlaneseq
    %v723 = vshrl.u32 %v722, 7
    %v724 = vsub.s32 %v721, %v723
    %v725 = vrot.slane %v711, %v724
    %v726 = vlaneseq
    %v727 = vshrl.u32 %v726, 7
    %v728 = vsub.s32 0, %v727
    %v729 = vrot.slane %v718, %v728
    %v730 = vlaneseq
    %v731 = vshrl.u32 %v730, 7
    %v732 = vsub.s32 0, %v731
    %v733 = vrot.slane %v725, %v732
    %736 = vset.pattern.permute.xlu0 14
    %737 = vperm.xlu0 %736, %v69
    %v738 = vpop.permute.xlu0 %737
    %v740 = vmul.f32 %v729, %v738
    %v741 = vmul.f32 %v733, %v738
    %v742 = vadd.f32 %v697, %v740
    %v743 = vadd.f32 %v698, %v741
    %vm744 = vcmp.lt.s32.totalorder %v71, 15
    %v745 = vsel %vm744, %v68, %v67
    %746 = vrot.lane.b32.xlu0 %v745, 113
    %v747 = vpop.permute.xlu0 %746
    %v750 = vunpack.c.l.s4 1966171168
    %v751 = vunpack.c.0.s8 %v750
    %v752 = vlaneseq
    %v753 = vshrl.u32 %v752, 7
    %v754 = vsub.s32 %v751, %v753
    %v755 = vrot.slane %v747, %v754
    %v756 = vcombine.high %v755, %v755
    %v758 = vunpack.c.l.s4 1966171168
    %v759 = vunpack.c.0.s8 %v758
    %v760 = vlaneseq
    %v761 = vshrl.u32 %v760, 7
    %v762 = vsub.s32 %v759, %v761
    %v763 = vrot.slane %v755, %v762
    %v765 = vunpack.c.l.s4 1966171168
    %v766 = vunpack.c.0.s8 %v765
    %v767 = vlaneseq
    %v768 = vshrl.u32 %v767, 7
    %v769 = vsub.s32 %v766, %v768
    %v770 = vrot.slane %v756, %v769
    %v771 = vlaneseq
    %v772 = vshrl.u32 %v771, 7
    %v773 = vsub.s32 0, %v772
    %v774 = vrot.slane %v763, %v773
    %v775 = vlaneseq
    %v776 = vshrl.u32 %v775, 7
    %v777 = vsub.s32 0, %v776
    %v778 = vrot.slane %v770, %v777
    %781 = vset.pattern.permute.xlu0 15
    %782 = vperm.xlu0 %781, %v69
    %v783 = vpop.permute.xlu0 %782
    %v785 = vmul.f32 %v774, %v783
    %v786 = vmul.f32 %v778, %v783
    %v787 = vadd.f32 %v742, %v785
    %v788 = vadd.f32 %v743, %v786
    %v789 = vld [vmem:[%s4] sm:$0xff]
    %v790 = vld [vmem:[%s4 + $0x8] sm:$0xff]
    %v791 = vld [vmem:[%s3] sm:$0xff]
    %v792 = vld [vmem:[%s3 + $0x8] sm:$0xff]
    %vm793 = vcmp.ge.s32.totalorder %v71, 113
    %v794 = vsel %vm793, %v789, %v787
    %v795 = vsel %vm793, %v790, %v788
    %796 = vrot.lane.b32.xlu0 %v794, 15
    %v797 = vpop.permute.xlu0 %796
    %798 = vrot.lane.b32.xlu0 %v795, 15
    %v799 = vpop.permute.xlu0 %798
    %801 = vset.pattern.permute.xlu0 0
    %802 = vperm.xlu0 %801, %v791
    %v803 = vpop.permute.xlu0 %802
    %806 = vset.pattern.permute.xlu0 0
    %807 = vperm.xlu0 %806, %v792
    %v808 = vpop.permute.xlu0 %807
    %v810 = vmul.f32 %v797, %v803
    %v811 = vmul.f32 %v799, %v808
    %v812 = vadd.f32 %v810, 0.0
    %v813 = vadd.f32 %v811, 0.0
    %vm814 = vcmp.ge.s32.totalorder %v71, 114
    %v815 = vsel %vm814, %v789, %v787
    %v816 = vsel %vm814, %v790, %v788
    %817 = vrot.lane.b32.xlu0 %v815, 14
    %v818 = vpop.permute.xlu0 %817
    %819 = vrot.lane.b32.xlu0 %v816, 14
    %v820 = vpop.permute.xlu0 %819
    %821 = vset.pattern.permute.xlu0 1
    %822 = vperm.xlu0 %821, %v791
    %v823 = vpop.permute.xlu0 %822
    %825 = vset.pattern.permute.xlu0 1
    %826 = vperm.xlu0 %825, %v792
    %v827 = vpop.permute.xlu0 %826
    %v829 = vmul.f32 %v818, %v823
    %v830 = vmul.f32 %v820, %v827
    %v831 = vadd.f32 %v812, %v829
    %v832 = vadd.f32 %v813, %v830
    %vm833 = vcmp.ge.s32.totalorder %v71, 115
    %v834 = vsel %vm833, %v789, %v787
    %v835 = vsel %vm833, %v790, %v788
    %836 = vrot.lane.b32.xlu0 %v834, 13
    %v837 = vpop.permute.xlu0 %836
    %838 = vrot.lane.b32.xlu0 %v835, 13
    %v839 = vpop.permute.xlu0 %838
    %840 = vset.pattern.permute.xlu0 2
    %841 = vperm.xlu0 %840, %v791
    %v842 = vpop.permute.xlu0 %841
    %844 = vset.pattern.permute.xlu0 2
    %845 = vperm.xlu0 %844, %v792
    %v846 = vpop.permute.xlu0 %845
    %v848 = vmul.f32 %v837, %v842
    %v849 = vmul.f32 %v839, %v846
    %v850 = vadd.f32 %v831, %v848
    %v851 = vadd.f32 %v832, %v849
    %vm852 = vcmp.ge.s32.totalorder %v71, 116
    %v853 = vsel %vm852, %v789, %v787
    %v854 = vsel %vm852, %v790, %v788
    %855 = vrot.lane.b32.xlu0 %v853, 12
    %v856 = vpop.permute.xlu0 %855
    %857 = vrot.lane.b32.xlu0 %v854, 12
    %v858 = vpop.permute.xlu0 %857
    %859 = vset.pattern.permute.xlu0 3
    %860 = vperm.xlu0 %859, %v791
    %v861 = vpop.permute.xlu0 %860
    %863 = vset.pattern.permute.xlu0 3
    %864 = vperm.xlu0 %863, %v792
    %v865 = vpop.permute.xlu0 %864
    %v867 = vmul.f32 %v856, %v861
    %v868 = vmul.f32 %v858, %v865
    %v869 = vadd.f32 %v850, %v867
    %v870 = vadd.f32 %v851, %v868
    %vm871 = vcmp.ge.s32.totalorder %v71, 117
    %v872 = vsel %vm871, %v789, %v787
    %v873 = vsel %vm871, %v790, %v788
    %874 = vrot.lane.b32.xlu0 %v872, 11
    %v875 = vpop.permute.xlu0 %874
    %876 = vrot.lane.b32.xlu0 %v873, 11
    %v877 = vpop.permute.xlu0 %876
    %878 = vset.pattern.permute.xlu0 4
    %879 = vperm.xlu0 %878, %v791
    %v880 = vpop.permute.xlu0 %879
    %882 = vset.pattern.permute.xlu0 4
    %883 = vperm.xlu0 %882, %v792
    %v884 = vpop.permute.xlu0 %883
    %v886 = vmul.f32 %v875, %v880
    %v887 = vmul.f32 %v877, %v884
    %v888 = vadd.f32 %v869, %v886
    %v889 = vadd.f32 %v870, %v887
    %vm890 = vcmp.ge.s32.totalorder %v71, 118
    %v891 = vsel %vm890, %v789, %v787
    %v892 = vsel %vm890, %v790, %v788
    %893 = vrot.lane.b32.xlu0 %v891, 10
    %v894 = vpop.permute.xlu0 %893
    %895 = vrot.lane.b32.xlu0 %v892, 10
    %v896 = vpop.permute.xlu0 %895
    %897 = vset.pattern.permute.xlu0 5
    %898 = vperm.xlu0 %897, %v791
    %v899 = vpop.permute.xlu0 %898
    %901 = vset.pattern.permute.xlu0 5
    %902 = vperm.xlu0 %901, %v792
    %v903 = vpop.permute.xlu0 %902
    %v905 = vmul.f32 %v894, %v899
    %v906 = vmul.f32 %v896, %v903
    %v907 = vadd.f32 %v888, %v905
    %v908 = vadd.f32 %v889, %v906
    %vm909 = vcmp.ge.s32.totalorder %v71, 119
    %v910 = vsel %vm909, %v789, %v787
    %v911 = vsel %vm909, %v790, %v788
    %912 = vrot.lane.b32.xlu0 %v910, 9
    %v913 = vpop.permute.xlu0 %912
    %914 = vrot.lane.b32.xlu0 %v911, 9
    %v915 = vpop.permute.xlu0 %914
    %916 = vset.pattern.permute.xlu0 6
    %917 = vperm.xlu0 %916, %v791
    %v918 = vpop.permute.xlu0 %917
    %920 = vset.pattern.permute.xlu0 6
    %921 = vperm.xlu0 %920, %v792
    %v922 = vpop.permute.xlu0 %921
    %v924 = vmul.f32 %v913, %v918
    %v925 = vmul.f32 %v915, %v922
    %v926 = vadd.f32 %v907, %v924
    %v927 = vadd.f32 %v908, %v925
    %vm928 = vcmp.ge.s32.totalorder %v71, 120
    %v929 = vsel %vm928, %v789, %v787
    %v930 = vsel %vm928, %v790, %v788
    %931 = vrot.lane.b32.xlu0 %v929, 8
    %v932 = vpop.permute.xlu0 %931
    %933 = vrot.lane.b32.xlu0 %v930, 8
    %v934 = vpop.permute.xlu0 %933
    %935 = vset.pattern.permute.xlu0 7
    %936 = vperm.xlu0 %935, %v791
    %v937 = vpop.permute.xlu0 %936
    %939 = vset.pattern.permute.xlu0 7
    %940 = vperm.xlu0 %939, %v792
    %v941 = vpop.permute.xlu0 %940
    %v943 = vmul.f32 %v932, %v937
    %v944 = vmul.f32 %v934, %v941
    %v945 = vadd.f32 %v926, %v943
    %v946 = vadd.f32 %v927, %v944
    %vm947 = vcmp.ge.s32.totalorder %v71, 121
    %v948 = vsel %vm947, %v789, %v787
    %v949 = vsel %vm947, %v790, %v788
    %950 = vrot.lane.b32.xlu0 %v948, 7
    %v951 = vpop.permute.xlu0 %950
    %952 = vrot.lane.b32.xlu0 %v949, 7
    %v953 = vpop.permute.xlu0 %952
    %954 = vset.pattern.permute.xlu0 8
    %955 = vperm.xlu0 %954, %v791
    %v956 = vpop.permute.xlu0 %955
    %958 = vset.pattern.permute.xlu0 8
    %959 = vperm.xlu0 %958, %v792
    %v960 = vpop.permute.xlu0 %959
    %v962 = vmul.f32 %v951, %v956
    %v963 = vmul.f32 %v953, %v960
    %v964 = vadd.f32 %v945, %v962
    %v965 = vadd.f32 %v946, %v963
    %vm966 = vcmp.ge.s32.totalorder %v71, 122
    %v967 = vsel %vm966, %v789, %v787
    %v968 = vsel %vm966, %v790, %v788
    %969 = vrot.lane.b32.xlu0 %v967, 6
    %v970 = vpop.permute.xlu0 %969
    %971 = vrot.lane.b32.xlu0 %v968, 6
    %v972 = vpop.permute.xlu0 %971
    %973 = vset.pattern.permute.xlu0 9
    %974 = vperm.xlu0 %973, %v791
    %v975 = vpop.permute.xlu0 %974
    %977 = vset.pattern.permute.xlu0 9
    %978 = vperm.xlu0 %977, %v792
    %v979 = vpop.permute.xlu0 %978
    %v981 = vmul.f32 %v970, %v975
    %v982 = vmul.f32 %v972, %v979
    %v983 = vadd.f32 %v964, %v981
    %v984 = vadd.f32 %v965, %v982
    %vm985 = vcmp.ge.s32.totalorder %v71, 123
    %v986 = vsel %vm985, %v789, %v787
    %v987 = vsel %vm985, %v790, %v788
    %988 = vrot.lane.b32.xlu0 %v986, 5
    %v989 = vpop.permute.xlu0 %988
    %990 = vrot.lane.b32.xlu0 %v987, 5
    %v991 = vpop.permute.xlu0 %990
    %992 = vset.pattern.permute.xlu0 10
    %993 = vperm.xlu0 %992, %v791
    %v994 = vpop.permute.xlu0 %993
    %996 = vset.pattern.permute.xlu0 10
    %997 = vperm.xlu0 %996, %v792
    %v998 = vpop.permute.xlu0 %997
    %v1000 = vmul.f32 %v989, %v994
    %v1001 = vmul.f32 %v991, %v998
    %v1002 = vadd.f32 %v983, %v1000
    %v1003 = vadd.f32 %v984, %v1001
    %vm1004 = vcmp.ge.s32.totalorder %v71, 124
    %v1005 = vsel %vm1004, %v789, %v787
    %v1006 = vsel %vm1004, %v790, %v788
    %1007 = vrot.lane.b32.xlu0 %v1005, 4
    %v1008 = vpop.permute.xlu0 %1007
    %1009 = vrot.lane.b32.xlu0 %v1006, 4
    %v1010 = vpop.permute.xlu0 %1009
    %1011 = vset.pattern.permute.xlu0 11
    %1012 = vperm.xlu0 %1011, %v791
    %v1013 = vpop.permute.xlu0 %1012
    %1015 = vset.pattern.permute.xlu0 11
    %1016 = vperm.xlu0 %1015, %v792
    %v1017 = vpop.permute.xlu0 %1016
    %v1019 = vmul.f32 %v1008, %v1013
    %v1020 = vmul.f32 %v1010, %v1017
    %v1021 = vadd.f32 %v1002, %v1019
    %v1022 = vadd.f32 %v1003, %v1020
    %vm1023 = vcmp.ge.s32.totalorder %v71, 125
    %v1024 = vsel %vm1023, %v789, %v787
    %v1025 = vsel %vm1023, %v790, %v788
    %1026 = vrot.lane.b32.xlu0 %v1024, 3
    %v1027 = vpop.permute.xlu0 %1026
    %1028 = vrot.lane.b32.xlu0 %v1025, 3
    %v1029 = vpop.permute.xlu0 %1028
    %1030 = vset.pattern.permute.xlu0 12
    %1031 = vperm.xlu0 %1030, %v791
    %v1032 = vpop.permute.xlu0 %1031
    %1034 = vset.pattern.permute.xlu0 12
    %1035 = vperm.xlu0 %1034, %v792
    %v1036 = vpop.permute.xlu0 %1035
    %v1038 = vmul.f32 %v1027, %v1032
    %v1039 = vmul.f32 %v1029, %v1036
    %v1040 = vadd.f32 %v1021, %v1038
    %v1041 = vadd.f32 %v1022, %v1039
    %vm1042 = vcmp.ge.s32.totalorder %v71, 126
    %v1043 = vsel %vm1042, %v789, %v787
    %v1044 = vsel %vm1042, %v790, %v788
    %1045 = vrot.lane.b32.xlu0 %v1043, 2
    %v1046 = vpop.permute.xlu0 %1045
    %1047 = vrot.lane.b32.xlu0 %v1044, 2
    %v1048 = vpop.permute.xlu0 %1047
    %1049 = vset.pattern.permute.xlu0 13
    %1050 = vperm.xlu0 %1049, %v791
    %v1051 = vpop.permute.xlu0 %1050
    %1053 = vset.pattern.permute.xlu0 13
    %1054 = vperm.xlu0 %1053, %v792
    %v1055 = vpop.permute.xlu0 %1054
    %v1057 = vmul.f32 %v1046, %v1051
    %v1058 = vmul.f32 %v1048, %v1055
    %v1059 = vadd.f32 %v1040, %v1057
    %v1060 = vadd.f32 %v1041, %v1058
    %vm1061 = vcmp.ge.s32.totalorder %v71, 127
    %v1062 = vsel %vm1061, %v789, %v787
    %v1063 = vsel %vm1061, %v790, %v788
    %1064 = vrot.lane.b32.xlu0 %v1062, 1
    %v1065 = vpop.permute.xlu0 %1064
    %1066 = vrot.lane.b32.xlu0 %v1063, 1
    %v1067 = vpop.permute.xlu0 %1066
    %1068 = vset.pattern.permute.xlu0 14
    %1069 = vperm.xlu0 %1068, %v791
    %v1070 = vpop.permute.xlu0 %1069
    %1072 = vset.pattern.permute.xlu0 14
    %1073 = vperm.xlu0 %1072, %v792
    %v1074 = vpop.permute.xlu0 %1073
    %v1076 = vmul.f32 %v1065, %v1070
    %v1077 = vmul.f32 %v1067, %v1074
    %v1078 = vadd.f32 %v1059, %v1076
    %v1079 = vadd.f32 %v1060, %v1077
    %1080 = vset.pattern.permute.xlu0 15
    %1081 = vperm.xlu0 %1080, %v791
    %v1082 = vpop.permute.xlu0 %1081
    %1084 = vset.pattern.permute.xlu0 15
    %1085 = vperm.xlu0 %1084, %v792
    %v1086 = vpop.permute.xlu0 %1085
    %v1088 = vmul.f32 %v787, %v1082
    %v1089 = vmul.f32 %v788, %v1086
    %v1090 = vadd.f32 %v1078, %v1088
    %v1091 = vadd.f32 %v1079, %v1089
    %1092 = vst [vmem:[#allocation5] sm:$0xff] %v1090
    %1093 = vst [vmem:[#allocation5 + $0x8] sm:$0xff] %v1091
    %v1094 = vld [vmem:[#allocation2] sm:$0xff]
    %v1095 = vld [vmem:[#allocation2 + $0x8] sm:$0xff]
    %v1096 = vld [vmem:[#allocation2 + $0x10] sm:$0xff]
    %v1097 = vld [vmem:[#allocation2 + $0x18] sm:$0xff]
    %v1098 = vld [vmem:[#allocation2 + $0x20] sm:$0xff]
    %v1099 = vld [vmem:[#allocation2 + $0x28] sm:$0xff]
    %v1100 = vld [vmem:[#allocation2 + $0x30] sm:$0xff]
    %v1101 = vld [vmem:[#allocation2 + $0x38] sm:$0xff]
    %v1102 = vld [vmem:[#allocation2 + $0x40] sm:$0xff]
    %v1103 = vld [vmem:[#allocation2 + $0x48] sm:$0xff]
    %v1104 = vld [vmem:[#allocation2 + $0x50] sm:$0xff]
    %v1105 = vld [vmem:[#allocation2 + $0x58] sm:$0xff]
    %v1106 = vld [vmem:[#allocation2 + $0x60] sm:$0xff]
    %v1107 = vld [vmem:[#allocation2 + $0x68] sm:$0xff]
    %v1108 = vld [vmem:[#allocation2 + $0x70] sm:$0xff]
    %v1109 = vld [vmem:[#allocation2 + $0x78] sm:$0xff]
    %v1110 = vld [vmem:[#allocation2 + $0x80] sm:$0xff]
    %v1111 = vld [vmem:[#allocation2 + $0x88] sm:$0xff]
    %v1112 = vld [vmem:[#allocation2 + $0x90] sm:$0xff]
    %v1113 = vld [vmem:[#allocation2 + $0x98] sm:$0xff]
    %v1114 = vld [vmem:[#allocation2 + $0xa0] sm:$0xff]
    %v1115 = vld [vmem:[#allocation2 + $0xa8] sm:$0xff]
    %v1116 = vld [vmem:[#allocation2 + $0xb0] sm:$0xff]
    %v1117 = vld [vmem:[#allocation2 + $0xb8] sm:$0xff]
    %v1118 = vld [vmem:[#allocation2 + $0xc0] sm:$0xff]
    %v1119 = vld [vmem:[#allocation2 + $0xc8] sm:$0xff]
    %v1120 = vld [vmem:[#allocation2 + $0xd0] sm:$0xff]
    %v1121 = vld [vmem:[#allocation2 + $0xd8] sm:$0xff]
    %v1122 = vld [vmem:[#allocation2 + $0xe0] sm:$0xff]
    %v1123 = vld [vmem:[#allocation2 + $0xe8] sm:$0xff]
    %v1124 = vld [vmem:[#allocation2 + $0xf0] sm:$0xff]
    %v1125 = vld [vmem:[#allocation2 + $0xf8] sm:$0xff]
    %v1126 = vand.u32 %v1095, 4294901760
    %1127 = vmatprep.subr.mxu0 %v1126
    %v1128 = vand.u32 %v1094, 4294901760
    %1129 = vmatpush1.msra.mxu0 %v1128
    %v1130 = vand.u32 %v1097, 4294901760
    %1131 = vmatprep.subr.mxu0 %v1130
    %v1132 = vand.u32 %v1096, 4294901760
    %1133 = vmatpush1.msra.mxu0 %v1132
    %v1134 = vand.u32 %v1099, 4294901760
    %1135 = vmatprep.subr.mxu0 %v1134
    %v1136 = vand.u32 %v1098, 4294901760
    %1137 = vmatpush1.msra.mxu0 %v1136
    %v1138 = vand.u32 %v1101, 4294901760
    %1139 = vmatprep.subr.mxu0 %v1138
    %v1140 = vand.u32 %v1100, 4294901760
    %1141 = vmatpush1.msra.mxu0 %v1140
    %v1142 = vand.u32 %v1103, 4294901760
    %1143 = vmatprep.subr.mxu0 %v1142
    %v1144 = vand.u32 %v1102, 4294901760
    %1145 = vmatpush1.msra.mxu0 %v1144
    %v1146 = vand.u32 %v1105, 4294901760
    %1147 = vmatprep.subr.mxu0 %v1146
    %v1148 = vand.u32 %v1104, 4294901760
    %1149 = vmatpush1.msra.mxu0 %v1148
    %v1150 = vand.u32 %v1107, 4294901760
    %1151 = vmatprep.subr.mxu0 %v1150
    %v1152 = vand.u32 %v1106, 4294901760
    %1153 = vmatpush1.msra.mxu0 %v1152
    %v1154 = vand.u32 %v1109, 4294901760
    %1155 = vmatprep.subr.mxu0 %v1154
    %v1156 = vand.u32 %v1108, 4294901760
    %1157 = vmatpush1.msra.mxu0 %v1156
    %v1158 = vand.u32 %v1111, 4294901760
    %1159 = vmatprep.subr.mxu0 %v1158
    %v1160 = vand.u32 %v1110, 4294901760
    %1161 = vmatpush1.msra.mxu0 %v1160
    %v1162 = vand.u32 %v1113, 4294901760
    %1163 = vmatprep.subr.mxu0 %v1162
    %v1164 = vand.u32 %v1112, 4294901760
    %1165 = vmatpush1.msra.mxu0 %v1164
    %v1166 = vand.u32 %v1115, 4294901760
    %1167 = vmatprep.subr.mxu0 %v1166
    %v1168 = vand.u32 %v1114, 4294901760
    %1169 = vmatpush1.msra.mxu0 %v1168
    %v1170 = vand.u32 %v1117, 4294901760
    %1171 = vmatprep.subr.mxu0 %v1170
    %v1172 = vand.u32 %v1116, 4294901760
    %1173 = vmatpush1.msra.mxu0 %v1172
    %v1174 = vand.u32 %v1119, 4294901760
    %1175 = vmatprep.subr.mxu0 %v1174
    %v1176 = vand.u32 %v1118, 4294901760
    %1177 = vmatpush1.msra.mxu0 %v1176
    %v1178 = vand.u32 %v1121, 4294901760
    %1179 = vmatprep.subr.mxu0 %v1178
    %v1180 = vand.u32 %v1120, 4294901760
    %1181 = vmatpush1.msra.mxu0 %v1180
    %v1182 = vand.u32 %v1123, 4294901760
    %1183 = vmatprep.subr.mxu0 %v1182
    %v1184 = vand.u32 %v1122, 4294901760
    %1185 = vmatpush1.msra.mxu0 %v1184
    %v1186 = vand.u32 %v1125, 4294901760
    %1187 = vmatprep.subr.mxu0 %v1186
    %v1188 = vand.u32 %v1124, 4294901760
    %1189 = vmatpush1.msra.mxu0 %v1188
    %1190 = vmatprep.subr.mxu0 0.0
    %1191 = vmatpush1.msra.mxu0 0.0
    %1192 = vmatprep.subr.mxu0 0.0
    %1193 = vmatpush1.msra.mxu0 0.0
    %1194 = vmatprep.subr.mxu0 0.0
    %1195 = vmatpush1.msra.mxu0 0.0
    %1196 = vmatprep.subr.mxu0 0.0
    %1197 = vmatpush1.msra.mxu0 0.0
    %1198 = vmatprep.subr.mxu0 0.0
    %1199 = vmatpush1.msra.mxu0 0.0
    %1200 = vmatprep.subr.mxu0 0.0
    %1201 = vmatpush1.msra.mxu0 0.0
    %1202 = vmatprep.subr.mxu0 0.0
    %1203 = vmatpush1.msra.mxu0 0.0
    %1204 = vmatprep.subr.mxu0 0.0
    %1205 = vmatpush1.msra.mxu0 0.0
    %1206 = vmatprep.subr.mxu0 0.0
    %1207 = vmatpush1.msra.mxu0 0.0
    %1208 = vmatprep.subr.mxu0 0.0
    %1209 = vmatpush1.msra.mxu0 0.0
    %1210 = vmatprep.subr.mxu0 0.0
    %1211 = vmatpush1.msra.mxu0 0.0
    %1212 = vmatprep.subr.mxu0 0.0
    %1213 = vmatpush1.msra.mxu0 0.0
    %1214 = vmatprep.subr.mxu0 0.0
    %1215 = vmatpush1.msra.mxu0 0.0
    %1216 = vmatprep.subr.mxu0 0.0
    %1217 = vmatpush1.msra.mxu0 0.0
    %1218 = vmatprep.subr.mxu0 0.0
    %1219 = vmatpush1.msra.mxu0 0.0
    %1220 = vmatprep.subr.mxu0 0.0
    %1221 = vmatpush1.msra.mxu0 0.0
    %1222 = vmatprep.mubr.f32.mxu0 0.0
    %v1223 = vand.u32 %v1090, 4294901760
    %v1224 = vsub.f32 %v1090, %v1223
    %v1225 = vand.u32 %v1224, 4294901760
    %v1226 = vsub.f32 %v1224, %v1225
    %v1227 = vand.u32 %v1226, 4294901760
    %1228 = vmatmul.mubr.f32.gmra.mrb[0].mxu0 %v1227
    %v1229 = vpop.f32.mrb[0].mxu0
    %v1230 = vadd.f32 0.0, %v1229
    %v1231 = vpop.f32.mrb[0].mxu0
    %v1232 = vadd.f32 0.0, %v1231
    %1233 = vmatprep.mubr.f32.mxu0 0.0
    %v1234 = vand.u32 %v1091, 4294901760
    %v1235 = vsub.f32 %v1091, %v1234
    %v1236 = vand.u32 %v1235, 4294901760
    %v1237 = vsub.f32 %v1235, %v1236
    %v1238 = vand.u32 %v1237, 4294901760
    %1239 = vmatmul.mubr.f32.gmra.mrb[0].mxu0 %v1238
    %v1240 = vpop.f32.mrb[0].mxu0
    %v1241 = vadd.f32 0.0, %v1240
    %v1242 = vpop.f32.mrb[0].mxu0
    %v1243 = vadd.f32 0.0, %v1242
    %1244 = vdwg.mxu0
    %v1245 = vand.u32 %v1095, 4294901760
    %v1246 = vsub.f32 %v1095, %v1245
    %v1247 = vand.u32 %v1246, 4294901760
    %v1248 = vsub.f32 %v1246, %v1247
    %v1249 = vand.u32 %v1248, 4294901760
    %1250 = vmatprep.subr.mxu0 %v1249
    %v1251 = vand.u32 %v1094, 4294901760
    %v1252 = vsub.f32 %v1094, %v1251
    %v1253 = vand.u32 %v1252, 4294901760
    %v1254 = vsub.f32 %v1252, %v1253
    %v1255 = vand.u32 %v1254, 4294901760
    %1256 = vmatpush1.msra.mxu0 %v1255
    %v1257 = vand.u32 %v1097, 4294901760
    %v1258 = vsub.f32 %v1097, %v1257
    %v1259 = vand.u32 %v1258, 4294901760
    %v1260 = vsub.f32 %v1258, %v1259
    %v1261 = vand.u32 %v1260, 4294901760
    %1262 = vmatprep.subr.mxu0 %v1261
    %v1263 = vand.u32 %v1096, 4294901760
    %v1264 = vsub.f32 %v1096, %v1263
    %v1265 = vand.u32 %v1264, 4294901760
    %v1266 = vsub.f32 %v1264, %v1265
    %v1267 = vand.u32 %v1266, 4294901760
    %1268 = vmatpush1.msra.mxu0 %v1267
    %v1269 = vand.u32 %v1099, 4294901760
    %v1270 = vsub.f32 %v1099, %v1269
    %v1271 = vand.u32 %v1270, 4294901760
    %v1272 = vsub.f32 %v1270, %v1271
    %v1273 = vand.u32 %v1272, 4294901760
    %1274 = vmatprep.subr.mxu0 %v1273
    %v1275 = vand.u32 %v1098, 4294901760
    %v1276 = vsub.f32 %v1098, %v1275
    %v1277 = vand.u32 %v1276, 4294901760
    %v1278 = vsub.f32 %v1276, %v1277
    %v1279 = vand.u32 %v1278, 4294901760
    %1280 = vmatpush1.msra.mxu0 %v1279
    %v1281 = vand.u32 %v1101, 4294901760
    %v1282 = vsub.f32 %v1101, %v1281
    %v1283 = vand.u32 %v1282, 4294901760
    %v1284 = vsub.f32 %v1282, %v1283
    %v1285 = vand.u32 %v1284, 4294901760
    %1286 = vmatprep.subr.mxu0 %v1285
    %v1287 = vand.u32 %v1100, 4294901760
    %v1288 = vsub.f32 %v1100, %v1287
    %v1289 = vand.u32 %v1288, 4294901760
    %v1290 = vsub.f32 %v1288, %v1289
    %v1291 = vand.u32 %v1290, 4294901760
    %1292 = vmatpush1.msra.mxu0 %v1291
    %v1293 = vand.u32 %v1103, 4294901760
    %v1294 = vsub.f32 %v1103, %v1293
    %v1295 = vand.u32 %v1294, 4294901760
    %v1296 = vsub.f32 %v1294, %v1295
    %v1297 = vand.u32 %v1296, 4294901760
    %1298 = vmatprep.subr.mxu0 %v1297
    %v1299 = vand.u32 %v1102, 4294901760
    %v1300 = vsub.f32 %v1102, %v1299
    %v1301 = vand.u32 %v1300, 4294901760
    %v1302 = vsub.f32 %v1300, %v1301
    %v1303 = vand.u32 %v1302, 4294901760
    %1304 = vmatpush1.msra.mxu0 %v1303
    %v1305 = vand.u32 %v1105, 4294901760
    %v1306 = vsub.f32 %v1105, %v1305
    %v1307 = vand.u32 %v1306, 4294901760
    %v1308 = vsub.f32 %v1306, %v1307
    %v1309 = vand.u32 %v1308, 4294901760
    %1310 = vmatprep.subr.mxu0 %v1309
    %v1311 = vand.u32 %v1104, 4294901760
    %v1312 = vsub.f32 %v1104, %v1311
    %v1313 = vand.u32 %v1312, 4294901760
    %v1314 = vsub.f32 %v1312, %v1313
    %v1315 = vand.u32 %v1314, 4294901760
    %1316 = vmatpush1.msra.mxu0 %v1315
    %v1317 = vand.u32 %v1107, 4294901760
    %v1318 = vsub.f32 %v1107, %v1317
    %v1319 = vand.u32 %v1318, 4294901760
    %v1320 = vsub.f32 %v1318, %v1319
    %v1321 = vand.u32 %v1320, 4294901760
    %1322 = vmatprep.subr.mxu0 %v1321
    %v1323 = vand.u32 %v1106, 4294901760
    %v1324 = vsub.f32 %v1106, %v1323
    %v1325 = vand.u32 %v1324, 4294901760
    %v1326 = vsub.f32 %v1324, %v1325
    %v1327 = vand.u32 %v1326, 4294901760
    %1328 = vmatpush1.msra.mxu0 %v1327
    %v1329 = vand.u32 %v1109, 4294901760
    %v1330 = vsub.f32 %v1109, %v1329
    %v1331 = vand.u32 %v1330, 4294901760
    %v1332 = vsub.f32 %v1330, %v1331
    %v1333 = vand.u32 %v1332, 4294901760
    %1334 = vmatprep.subr.mxu0 %v1333
    %v1335 = vand.u32 %v1108, 4294901760
    %v1336 = vsub.f32 %v1108, %v1335
    %v1337 = vand.u32 %v1336, 4294901760
    %v1338 = vsub.f32 %v1336, %v1337
    %v1339 = vand.u32 %v1338, 4294901760
    %1340 = vmatpush1.msra.mxu0 %v1339
    %v1341 = vand.u32 %v1111, 4294901760
    %v1342 = vsub.f32 %v1111, %v1341
    %v1343 = vand.u32 %v1342, 4294901760
    %v1344 = vsub.f32 %v1342, %v1343
    %v1345 = vand.u32 %v1344, 4294901760
    %1346 = vmatprep.subr.mxu0 %v1345
    %v1347 = vand.u32 %v1110, 4294901760
    %v1348 = vsub.f32 %v1110, %v1347
    %v1349 = vand.u32 %v1348, 4294901760
    %v1350 = vsub.f32 %v1348, %v1349
    %v1351 = vand.u32 %v1350, 4294901760
    %1352 = vmatpush1.msra.mxu0 %v1351
    %v1353 = vand.u32 %v1113, 4294901760
    %v1354 = vsub.f32 %v1113, %v1353
    %v1355 = vand.u32 %v1354, 4294901760
    %v1356 = vsub.f32 %v1354, %v1355
    %v1357 = vand.u32 %v1356, 4294901760
    %1358 = vmatprep.subr.mxu0 %v1357
    %v1359 = vand.u32 %v1112, 4294901760
    %v1360 = vsub.f32 %v1112, %v1359
    %v1361 = vand.u32 %v1360, 4294901760
    %v1362 = vsub.f32 %v1360, %v1361
    %v1363 = vand.u32 %v1362, 4294901760
    %1364 = vmatpush1.msra.mxu0 %v1363
    %v1365 = vand.u32 %v1115, 4294901760
    %v1366 = vsub.f32 %v1115, %v1365
    %v1367 = vand.u32 %v1366, 4294901760
    %v1368 = vsub.f32 %v1366, %v1367
    %v1369 = vand.u32 %v1368, 4294901760
    %1370 = vmatprep.subr.mxu0 %v1369
    %v1371 = vand.u32 %v1114, 4294901760
    %v1372 = vsub.f32 %v1114, %v1371
    %v1373 = vand.u32 %v1372, 4294901760
    %v1374 = vsub.f32 %v1372, %v1373
    %v1375 = vand.u32 %v1374, 4294901760
    %1376 = vmatpush1.msra.mxu0 %v1375
    %v1377 = vand.u32 %v1117, 4294901760
    %v1378 = vsub.f32 %v1117, %v1377
    %v1379 = vand.u32 %v1378, 4294901760
    %v1380 = vsub.f32 %v1378, %v1379
    %v1381 = vand.u32 %v1380, 4294901760
    %1382 = vmatprep.subr.mxu0 %v1381
    %v1383 = vand.u32 %v1116, 4294901760
    %v1384 = vsub.f32 %v1116, %v1383
    %v1385 = vand.u32 %v1384, 4294901760
    %v1386 = vsub.f32 %v1384, %v1385
    %v1387 = vand.u32 %v1386, 4294901760
    %1388 = vmatpush1.msra.mxu0 %v1387
    %v1389 = vand.u32 %v1119, 4294901760
    %v1390 = vsub.f32 %v1119, %v1389
    %v1391 = vand.u32 %v1390, 4294901760
    %v1392 = vsub.f32 %v1390, %v1391
    %v1393 = vand.u32 %v1392, 4294901760
    %1394 = vmatprep.subr.mxu0 %v1393
    %v1395 = vand.u32 %v1118, 4294901760
    %v1396 = vsub.f32 %v1118, %v1395
    %v1397 = vand.u32 %v1396, 4294901760
    %v1398 = vsub.f32 %v1396, %v1397
    %v1399 = vand.u32 %v1398, 4294901760
    %1400 = vmatpush1.msra.mxu0 %v1399
    %v1401 = vand.u32 %v1121, 4294901760
    %v1402 = vsub.f32 %v1121, %v1401
    %v1403 = vand.u32 %v1402, 4294901760
    %v1404 = vsub.f32 %v1402, %v1403
    %v1405 = vand.u32 %v1404, 4294901760
    %1406 = vmatprep.subr.mxu0 %v1405
    %v1407 = vand.u32 %v1120, 4294901760
    %v1408 = vsub.f32 %v1120, %v1407
    %v1409 = vand.u32 %v1408, 4294901760
    %v1410 = vsub.f32 %v1408, %v1409
    %v1411 = vand.u32 %v1410, 4294901760
    %1412 = vmatpush1.msra.mxu0 %v1411
    %v1413 = vand.u32 %v1123, 4294901760
    %v1414 = vsub.f32 %v1123, %v1413
    %v1415 = vand.u32 %v1414, 4294901760
    %v1416 = vsub.f32 %v1414, %v1415
    %v1417 = vand.u32 %v1416, 4294901760
    %1418 = vmatprep.subr.mxu0 %v1417
    %v1419 = vand.u32 %v1122, 4294901760
    %v1420 = vsub.f32 %v1122, %v1419
    %v1421 = vand.u32 %v1420, 4294901760
    %v1422 = vsub.f32 %v1420, %v1421
    %v1423 = vand.u32 %v1422, 4294901760
    %1424 = vmatpush1.msra.mxu0 %v1423
    %v1425 = vand.u32 %v1125, 4294901760
    %v1426 = vsub.f32 %v1125, %v1425
    %v1427 = vand.u32 %v1426, 4294901760
    %v1428 = vsub.f32 %v1426, %v1427
    %v1429 = vand.u32 %v1428, 4294901760
    %1430 = vmatprep.subr.mxu0 %v1429
    %v1431 = vand.u32 %v1124, 4294901760
    %v1432 = vsub.f32 %v1124, %v1431
    %v1433 = vand.u32 %v1432, 4294901760
    %v1434 = vsub.f32 %v1432, %v1433
    %v1435 = vand.u32 %v1434, 4294901760
    %1436 = vmatpush1.msra.mxu0 %v1435
    %1437 = vmatprep.subr.mxu0 0.0
    %1438 = vmatpush1.msra.mxu0 0.0
    %1439 = vmatprep.subr.mxu0 0.0
    %1440 = vmatpush1.msra.mxu0 0.0
    %1441 = vmatprep.subr.mxu0 0.0
    %1442 = vmatpush1.msra.mxu0 0.0
    %1443 = vmatprep.subr.mxu0 0.0
    %1444 = vmatpush1.msra.mxu0 0.0
    %1445 = vmatprep.subr.mxu0 0.0
    %1446 = vmatpush1.msra.mxu0 0.0
    %1447 = vmatprep.subr.mxu0 0.0
    %1448 = vmatpush1.msra.mxu0 0.0
    %1449 = vmatprep.subr.mxu0 0.0
    %1450 = vmatpush1.msra.mxu0 0.0
    %1451 = vmatprep.subr.mxu0 0.0
    %1452 = vmatpush1.msra.mxu0 0.0
    %1453 = vmatprep.subr.mxu0 0.0
    %1454 = vmatpush1.msra.mxu0 0.0
    %1455 = vmatprep.subr.mxu0 0.0
    %1456 = vmatpush1.msra.mxu0 0.0
    %1457 = vmatprep.subr.mxu0 0.0
    %1458 = vmatpush1.msra.mxu0 0.0
    %1459 = vmatprep.subr.mxu0 0.0
    %1460 = vmatpush1.msra.mxu0 0.0
    %1461 = vmatprep.subr.mxu0 0.0
    %1462 = vmatpush1.msra.mxu0 0.0
    %1463 = vmatprep.subr.mxu0 0.0
    %1464 = vmatpush1.msra.mxu0 0.0
    %1465 = vmatprep.subr.mxu0 0.0
    %1466 = vmatpush1.msra.mxu0 0.0
    %1467 = vmatprep.subr.mxu0 0.0
    %1468 = vmatpush1.msra.mxu0 0.0
    %1469 = vmatprep.mubr.f32.mxu0 0.0
    %v1470 = vand.u32 %v1090, 4294901760
    %1471 = vmatmul.mubr.f32.gmra.mrb[0].mxu0 %v1470
    %v1472 = vpop.f32.mrb[0].mxu0
    %v1473 = vadd.f32 %v1230, %v1472
    %v1474 = vpop.f32.mrb[0].mxu0
    %v1475 = vadd.f32 %v1232, %v1474
    %1476 = vmatprep.mubr.f32.mxu0 0.0
    %v1477 = vand.u32 %v1091, 4294901760
    %1478 = vmatmul.mubr.f32.gmra.mrb[0].mxu0 %v1477
    %v1479 = vpop.f32.mrb[0].mxu0
    %v1480 = vadd.f32 %v1241, %v1479
    %v1481 = vpop.f32.mrb[0].mxu0
    %v1482 = vadd.f32 %v1243, %v1481
    %1483 = vdwg.mxu0
    %v1484 = vand.u32 %v1095, 4294901760
    %v1485 = vsub.f32 %v1095, %v1484
    %1486 = vmatprep.subr.mxu0 %v1485
    %v1487 = vand.u32 %v1094, 4294901760
    %v1488 = vsub.f32 %v1094, %v1487
    %1489 = vmatpush1.msra.mxu0 %v1488
    %v1490 = vand.u32 %v1097, 4294901760
    %v1491 = vsub.f32 %v1097, %v1490
    %1492 = vmatprep.subr.mxu0 %v1491
    %v1493 = vand.u32 %v1096, 4294901760
    %v1494 = vsub.f32 %v1096, %v1493
    %1495 = vmatpush1.msra.mxu0 %v1494
    %v1496 = vand.u32 %v1099, 4294901760
    %v1497 = vsub.f32 %v1099, %v1496
    %1498 = vmatprep.subr.mxu0 %v1497
    %v1499 = vand.u32 %v1098, 4294901760
    %v1500 = vsub.f32 %v1098, %v1499
    %1501 = vmatpush1.msra.mxu0 %v1500
    %v1502 = vand.u32 %v1101, 4294901760
    %v1503 = vsub.f32 %v1101, %v1502
    %1504 = vmatprep.subr.mxu0 %v1503
    %v1505 = vand.u32 %v1100, 4294901760
    %v1506 = vsub.f32 %v1100, %v1505
    %1507 = vmatpush1.msra.mxu0 %v1506
    %v1508 = vand.u32 %v1103, 4294901760
    %v1509 = vsub.f32 %v1103, %v1508
    %1510 = vmatprep.subr.mxu0 %v1509
    %v1511 = vand.u32 %v1102, 4294901760
    %v1512 = vsub.f32 %v1102, %v1511
    %1513 = vmatpush1.msra.mxu0 %v1512
    %v1514 = vand.u32 %v1105, 4294901760
    %v1515 = vsub.f32 %v1105, %v1514
    %1516 = vmatprep.subr.mxu0 %v1515
    %v1517 = vand.u32 %v1104, 4294901760
    %v1518 = vsub.f32 %v1104, %v1517
    %1519 = vmatpush1.msra.mxu0 %v1518
    %v1520 = vand.u32 %v1107, 4294901760
    %v1521 = vsub.f32 %v1107, %v1520
    %1522 = vmatprep.subr.mxu0 %v1521
    %v1523 = vand.u32 %v1106, 4294901760
    %v1524 = vsub.f32 %v1106, %v1523
    %1525 = vmatpush1.msra.mxu0 %v1524
    %v1526 = vand.u32 %v1109, 4294901760
    %v1527 = vsub.f32 %v1109, %v1526
    %1528 = vmatprep.subr.mxu0 %v1527
    %v1529 = vand.u32 %v1108, 4294901760
    %v1530 = vsub.f32 %v1108, %v1529
    %1531 = vmatpush1.msra.mxu0 %v1530
    %v1532 = vand.u32 %v1111, 4294901760
    %v1533 = vsub.f32 %v1111, %v1532
    %1534 = vmatprep.subr.mxu0 %v1533
    %v1535 = vand.u32 %v1110, 4294901760
    %v1536 = vsub.f32 %v1110, %v1535
    %1537 = vmatpush1.msra.mxu0 %v1536
    %v1538 = vand.u32 %v1113, 4294901760
    %v1539 = vsub.f32 %v1113, %v1538
    %1540 = vmatprep.subr.mxu0 %v1539
    %v1541 = vand.u32 %v1112, 4294901760
    %v1542 = vsub.f32 %v1112, %v1541
    %1543 = vmatpush1.msra.mxu0 %v1542
    %v1544 = vand.u32 %v1115, 4294901760
    %v1545 = vsub.f32 %v1115, %v1544
    %1546 = vmatprep.subr.mxu0 %v1545
    %v1547 = vand.u32 %v1114, 4294901760
    %v1548 = vsub.f32 %v1114, %v1547
    %1549 = vmatpush1.msra.mxu0 %v1548
    %v1550 = vand.u32 %v1117, 4294901760
    %v1551 = vsub.f32 %v1117, %v1550
    %1552 = vmatprep.subr.mxu0 %v1551
    %v1553 = vand.u32 %v1116, 4294901760
    %v1554 = vsub.f32 %v1116, %v1553
    %1555 = vmatpush1.msra.mxu0 %v1554
    %v1556 = vand.u32 %v1119, 4294901760
    %v1557 = vsub.f32 %v1119, %v1556
    %1558 = vmatprep.subr.mxu0 %v1557
    %v1559 = vand.u32 %v1118, 4294901760
    %v1560 = vsub.f32 %v1118, %v1559
    %1561 = vmatpush1.msra.mxu0 %v1560
    %v1562 = vand.u32 %v1121, 4294901760
    %v1563 = vsub.f32 %v1121, %v1562
    %1564 = vmatprep.subr.mxu0 %v1563
    %v1565 = vand.u32 %v1120, 4294901760
    %v1566 = vsub.f32 %v1120, %v1565
    %1567 = vmatpush1.msra.mxu0 %v1566
    %v1568 = vand.u32 %v1123, 4294901760
    %v1569 = vsub.f32 %v1123, %v1568
    %1570 = vmatprep.subr.mxu0 %v1569
    %v1571 = vand.u32 %v1122, 4294901760
    %v1572 = vsub.f32 %v1122, %v1571
    %1573 = vmatpush1.msra.mxu0 %v1572
    %v1574 = vand.u32 %v1125, 4294901760
    %v1575 = vsub.f32 %v1125, %v1574
    %1576 = vmatprep.subr.mxu0 %v1575
    %v1577 = vand.u32 %v1124, 4294901760
    %v1578 = vsub.f32 %v1124, %v1577
    %1579 = vmatpush1.msra.mxu0 %v1578
    %1580 = vmatprep.subr.mxu0 0.0
    %1581 = vmatpush1.msra.mxu0 0.0
    %1582 = vmatprep.subr.mxu0 0.0
    %1583 = vmatpush1.msra.mxu0 0.0
    %1584 = vmatprep.subr.mxu0 0.0
    %1585 = vmatpush1.msra.mxu0 0.0
    %1586 = vmatprep.subr.mxu0 0.0
    %1587 = vmatpush1.msra.mxu0 0.0
    %1588 = vmatprep.subr.mxu0 0.0
    %1589 = vmatpush1.msra.mxu0 0.0
    %1590 = vmatprep.subr.mxu0 0.0
    %1591 = vmatpush1.msra.mxu0 0.0
    %1592 = vmatprep.subr.mxu0 0.0
    %1593 = vmatpush1.msra.mxu0 0.0
    %1594 = vmatprep.subr.mxu0 0.0
    %1595 = vmatpush1.msra.mxu0 0.0
    %1596 = vmatprep.subr.mxu0 0.0
    %1597 = vmatpush1.msra.mxu0 0.0
    %1598 = vmatprep.subr.mxu0 0.0
    %1599 = vmatpush1.msra.mxu0 0.0
    %1600 = vmatprep.subr.mxu0 0.0
    %1601 = vmatpush1.msra.mxu0 0.0
    %1602 = vmatprep.subr.mxu0 0.0
    %1603 = vmatpush1.msra.mxu0 0.0
    %1604 = vmatprep.subr.mxu0 0.0
    %1605 = vmatpush1.msra.mxu0 0.0
    %1606 = vmatprep.subr.mxu0 0.0
    %1607 = vmatpush1.msra.mxu0 0.0
    %1608 = vmatprep.subr.mxu0 0.0
    %1609 = vmatpush1.msra.mxu0 0.0
    %1610 = vmatprep.subr.mxu0 0.0
    %1611 = vmatpush1.msra.mxu0 0.0
    %1612 = vmatprep.mubr.f32.mxu0 0.0
    %v1613 = vand.u32 %v1090, 4294901760
    %v1614 = vsub.f32 %v1090, %v1613
    %1615 = vmatmul.mubr.f32.gmra.mrb[0].mxu0 %v1614
    %v1616 = vpop.f32.mrb[0].mxu0
    %v1617 = vadd.f32 %v1473, %v1616
    %v1618 = vpop.f32.mrb[0].mxu0
    %v1619 = vadd.f32 %v1475, %v1618
    %1620 = vmatprep.mubr.f32.mxu0 0.0
    %v1621 = vand.u32 %v1091, 4294901760
    %v1622 = vsub.f32 %v1091, %v1621
    %1623 = vmatmul.mubr.f32.gmra.mrb[0].mxu0 %v1622
    %v1624 = vpop.f32.mrb[0].mxu0
    %v1625 = vadd.f32 %v1480, %v1624
    %v1626 = vpop.f32.mrb[0].mxu0
    %v1627 = vadd.f32 %v1482, %v1626
    %1628 = vdwg.mxu0
    %v1629 = vand.u32 %v1095, 4294901760
    %1630 = vmatprep.subr.mxu0 %v1629
    %v1631 = vand.u32 %v1094, 4294901760
    %1632 = vmatpush1.msra.mxu0 %v1631
    %v1633 = vand.u32 %v1097, 4294901760
    %1634 = vmatprep.subr.mxu0 %v1633
    %v1635 = vand.u32 %v1096, 4294901760
    %1636 = vmatpush1.msra.mxu0 %v1635
    %v1637 = vand.u32 %v1099, 4294901760
    %1638 = vmatprep.subr.mxu0 %v1637
    %v1639 = vand.u32 %v1098, 4294901760
    %1640 = vmatpush1.msra.mxu0 %v1639
    %v1641 = vand.u32 %v1101, 4294901760
    %1642 = vmatprep.subr.mxu0 %v1641
    %v1643 = vand.u32 %v1100, 4294901760
    %1644 = vmatpush1.msra.mxu0 %v1643
    %v1645 = vand.u32 %v1103, 4294901760
    %1646 = vmatprep.subr.mxu0 %v1645
    %v1647 = vand.u32 %v1102, 4294901760
    %1648 = vmatpush1.msra.mxu0 %v1647
    %v1649 = vand.u32 %v1105, 4294901760
    %1650 = vmatprep.subr.mxu0 %v1649
    %v1651 = vand.u32 %v1104, 4294901760
    %1652 = vmatpush1.msra.mxu0 %v1651
    %v1653 = vand.u32 %v1107, 4294901760
    %1654 = vmatprep.subr.mxu0 %v1653
    %v1655 = vand.u32 %v1106, 4294901760
    %1656 = vmatpush1.msra.mxu0 %v1655
    %v1657 = vand.u32 %v1109, 4294901760
    %1658 = vmatprep.subr.mxu0 %v1657
    %v1659 = vand.u32 %v1108, 4294901760
    %1660 = vmatpush1.msra.mxu0 %v1659
    %v1661 = vand.u32 %v1111, 4294901760
    %1662 = vmatprep.subr.mxu0 %v1661
    %v1663 = vand.u32 %v1110, 4294901760
    %1664 = vmatpush1.msra.mxu0 %v1663
    %v1665 = vand.u32 %v1113, 4294901760
    %1666 = vmatprep.subr.mxu0 %v1665
    %v1667 = vand.u32 %v1112, 4294901760
    %1668 = vmatpush1.msra.mxu0 %v1667
    %v1669 = vand.u32 %v1115, 4294901760
    %1670 = vmatprep.subr.mxu0 %v1669
    %v1671 = vand.u32 %v1114, 4294901760
    %1672 = vmatpush1.msra.mxu0 %v1671
    %v1673 = vand.u32 %v1117, 4294901760
    %1674 = vmatprep.subr.mxu0 %v1673
    %v1675 = vand.u32 %v1116, 4294901760
    %1676 = vmatpush1.msra.mxu0 %v1675
    %v1677 = vand.u32 %v1119, 4294901760
    %1678 = vmatprep.subr.mxu0 %v1677
    %v1679 = vand.u32 %v1118, 4294901760
    %1680 = vmatpush1.msra.mxu0 %v1679
    %v1681 = vand.u32 %v1121, 4294901760
    %1682 = vmatprep.subr.mxu0 %v1681
    %v1683 = vand.u32 %v1120, 4294901760
    %1684 = vmatpush1.msra.mxu0 %v1683
    %v1685 = vand.u32 %v1123, 4294901760
    %1686 = vmatprep.subr.mxu0 %v1685
    %v1687 = vand.u32 %v1122, 4294901760
    %1688 = vmatpush1.msra.mxu0 %v1687
    %v1689 = vand.u32 %v1125, 4294901760
    %1690 = vmatprep.subr.mxu0 %v1689
    %v1691 = vand.u32 %v1124, 4294901760
    %1692 = vmatpush1.msra.mxu0 %v1691
    %1693 = vmatprep.subr.mxu0 0.0
    %1694 = vmatpush1.msra.mxu0 0.0
    %1695 = vmatprep.subr.mxu0 0.0
    %1696 = vmatpush1.msra.mxu0 0.0
    %1697 = vmatprep.subr.mxu0 0.0
    %1698 = vmatpush1.msra.mxu0 0.0
    %1699 = vmatprep.subr.mxu0 0.0
    %1700 = vmatpush1.msra.mxu0 0.0
    %1701 = vmatprep.subr.mxu0 0.0
    %1702 = vmatpush1.msra.mxu0 0.0
    %1703 = vmatprep.subr.mxu0 0.0
    %1704 = vmatpush1.msra.mxu0 0.0
    %1705 = vmatprep.subr.mxu0 0.0
    %1706 = vmatpush1.msra.mxu0 0.0
    %1707 = vmatprep.subr.mxu0 0.0
    %1708 = vmatpush1.msra.mxu0 0.0
    %1709 = vmatprep.subr.mxu0 0.0
    %1710 = vmatpush1.msra.mxu0 0.0
    %1711 = vmatprep.subr.mxu0 0.0
    %1712 = vmatpush1.msra.mxu0 0.0
    %1713 = vmatprep.subr.mxu0 0.0
    %1714 = vmatpush1.msra.mxu0 0.0
    %1715 = vmatprep.subr.mxu0 0.0
    %1716 = vmatpush1.msra.mxu0 0.0
    %1717 = vmatprep.subr.mxu0 0.0
    %1718 = vmatpush1.msra.mxu0 0.0
    %1719 = vmatprep.subr.mxu0 0.0
    %1720 = vmatpush1.msra.mxu0 0.0
    %1721 = vmatprep.subr.mxu0 0.0
    %1722 = vmatpush1.msra.mxu0 0.0
    %1723 = vmatprep.subr.mxu0 0.0
    %1724 = vmatpush1.msra.mxu0 0.0
    %1725 = vmatprep.mubr.f32.mxu0 0.0
    %v1726 = vand.u32 %v1090, 4294901760
    %v1727 = vsub.f32 %v1090, %v1726
    %v1728 = vand.u32 %v1727, 4294901760
    %1729 = vmatmul.mubr.f32.gmra.mrb[0].mxu0 %v1728
    %v1730 = vpop.f32.mrb[0].mxu0
    %v1731 = vadd.f32 %v1617, %v1730
    %v1732 = vpop.f32.mrb[0].mxu0
    %v1733 = vadd.f32 %v1619, %v1732
    %1734 = vmatprep.mubr.f32.mxu0 0.0
    %v1735 = vand.u32 %v1091, 4294901760
    %v1736 = vsub.f32 %v1091, %v1735
    %v1737 = vand.u32 %v1736, 4294901760
    %1738 = vmatmul.mubr.f32.gmra.mrb[0].mxu0 %v1737
    %v1739 = vpop.f32.mrb[0].mxu0
    %v1740 = vadd.f32 %v1625, %v1739
    %v1741 = vpop.f32.mrb[0].mxu0
    %v1742 = vadd.f32 %v1627, %v1741
    %1743 = vdwg.mxu0
    %v1744 = vand.u32 %v1095, 4294901760
    %v1745 = vsub.f32 %v1095, %v1744
    %v1746 = vand.u32 %v1745, 4294901760
    %1747 = vmatprep.subr.mxu0 %v1746
    %v1748 = vand.u32 %v1094, 4294901760
    %v1749 = vsub.f32 %v1094, %v1748
    %v1750 = vand.u32 %v1749, 4294901760
    %1751 = vmatpush1.msra.mxu0 %v1750
    %v1752 = vand.u32 %v1097, 4294901760
    %v1753 = vsub.f32 %v1097, %v1752
    %v1754 = vand.u32 %v1753, 4294901760
    %1755 = vmatprep.subr.mxu0 %v1754
    %v1756 = vand.u32 %v1096, 4294901760
    %v1757 = vsub.f32 %v1096, %v1756
    %v1758 = vand.u32 %v1757, 4294901760
    %1759 = vmatpush1.msra.mxu0 %v1758
    %v1760 = vand.u32 %v1099, 4294901760
    %v1761 = vsub.f32 %v1099, %v1760
    %v1762 = vand.u32 %v1761, 4294901760
    %1763 = vmatprep.subr.mxu0 %v1762
    %v1764 = vand.u32 %v1098, 4294901760
    %v1765 = vsub.f32 %v1098, %v1764
    %v1766 = vand.u32 %v1765, 4294901760
    %1767 = vmatpush1.msra.mxu0 %v1766
    %v1768 = vand.u32 %v1101, 4294901760
    %v1769 = vsub.f32 %v1101, %v1768
    %v1770 = vand.u32 %v1769, 4294901760
    %1771 = vmatprep.subr.mxu0 %v1770
    %v1772 = vand.u32 %v1100, 4294901760
    %v1773 = vsub.f32 %v1100, %v1772
    %v1774 = vand.u32 %v1773, 4294901760
    %1775 = vmatpush1.msra.mxu0 %v1774
    %v1776 = vand.u32 %v1103, 4294901760
    %v1777 = vsub.f32 %v1103, %v1776
    %v1778 = vand.u32 %v1777, 4294901760
    %1779 = vmatprep.subr.mxu0 %v1778
    %v1780 = vand.u32 %v1102, 4294901760
    %v1781 = vsub.f32 %v1102, %v1780
    %v1782 = vand.u32 %v1781, 4294901760
    %1783 = vmatpush1.msra.mxu0 %v1782
    %v1784 = vand.u32 %v1105, 4294901760
    %v1785 = vsub.f32 %v1105, %v1784
    %v1786 = vand.u32 %v1785, 4294901760
    %1787 = vmatprep.subr.mxu0 %v1786
    %v1788 = vand.u32 %v1104, 4294901760
    %v1789 = vsub.f32 %v1104, %v1788
    %v1790 = vand.u32 %v1789, 4294901760
    %1791 = vmatpush1.msra.mxu0 %v1790
    %v1792 = vand.u32 %v1107, 4294901760
    %v1793 = vsub.f32 %v1107, %v1792
    %v1794 = vand.u32 %v1793, 4294901760
    %1795 = vmatprep.subr.mxu0 %v1794
    %v1796 = vand.u32 %v1106, 4294901760
    %v1797 = vsub.f32 %v1106, %v1796
    %v1798 = vand.u32 %v1797, 4294901760
    %1799 = vmatpush1.msra.mxu0 %v1798
    %v1800 = vand.u32 %v1109, 4294901760
    %v1801 = vsub.f32 %v1109, %v1800
    %v1802 = vand.u32 %v1801, 4294901760
    %1803 = vmatprep.subr.mxu0 %v1802
    %v1804 = vand.u32 %v1108, 4294901760
    %v1805 = vsub.f32 %v1108, %v1804
    %v1806 = vand.u32 %v1805, 4294901760
    %1807 = vmatpush1.msra.mxu0 %v1806
    %v1808 = vand.u32 %v1111, 4294901760
    %v1809 = vsub.f32 %v1111, %v1808
    %v1810 = vand.u32 %v1809, 4294901760
    %1811 = vmatprep.subr.mxu0 %v1810
    %v1812 = vand.u32 %v1110, 4294901760
    %v1813 = vsub.f32 %v1110, %v1812
    %v1814 = vand.u32 %v1813, 4294901760
    %1815 = vmatpush1.msra.mxu0 %v1814
    %v1816 = vand.u32 %v1113, 4294901760
    %v1817 = vsub.f32 %v1113, %v1816
    %v1818 = vand.u32 %v1817, 4294901760
    %1819 = vmatprep.subr.mxu0 %v1818
    %v1820 = vand.u32 %v1112, 4294901760
    %v1821 = vsub.f32 %v1112, %v1820
    %v1822 = vand.u32 %v1821, 4294901760
    %1823 = vmatpush1.msra.mxu0 %v1822
    %v1824 = vand.u32 %v1115, 4294901760
    %v1825 = vsub.f32 %v1115, %v1824
    %v1826 = vand.u32 %v1825, 4294901760
    %1827 = vmatprep.subr.mxu0 %v1826
    %v1828 = vand.u32 %v1114, 4294901760
    %v1829 = vsub.f32 %v1114, %v1828
    %v1830 = vand.u32 %v1829, 4294901760
    %1831 = vmatpush1.msra.mxu0 %v1830
    %v1832 = vand.u32 %v1117, 4294901760
    %v1833 = vsub.f32 %v1117, %v1832
    %v1834 = vand.u32 %v1833, 4294901760
    %1835 = vmatprep.subr.mxu0 %v1834
    %v1836 = vand.u32 %v1116, 4294901760
    %v1837 = vsub.f32 %v1116, %v1836
    %v1838 = vand.u32 %v1837, 4294901760
    %1839 = vmatpush1.msra.mxu0 %v1838
    %v1840 = vand.u32 %v1119, 4294901760
    %v1841 = vsub.f32 %v1119, %v1840
    %v1842 = vand.u32 %v1841, 4294901760
    %1843 = vmatprep.subr.mxu0 %v1842
    %v1844 = vand.u32 %v1118, 4294901760
    %v1845 = vsub.f32 %v1118, %v1844
    %v1846 = vand.u32 %v1845, 4294901760
    %1847 = vmatpush1.msra.mxu0 %v1846
    %v1848 = vand.u32 %v1121, 4294901760
    %v1849 = vsub.f32 %v1121, %v1848
    %v1850 = vand.u32 %v1849, 4294901760
    %1851 = vmatprep.subr.mxu0 %v1850
    %v1852 = vand.u32 %v1120, 4294901760
    %v1853 = vsub.f32 %v1120, %v1852
    %v1854 = vand.u32 %v1853, 4294901760
    %1855 = vmatpush1.msra.mxu0 %v1854
    %v1856 = vand.u32 %v1123, 4294901760
    %v1857 = vsub.f32 %v1123, %v1856
    %v1858 = vand.u32 %v1857, 4294901760
    %1859 = vmatprep.subr.mxu0 %v1858
    %v1860 = vand.u32 %v1122, 4294901760
    %v1861 = vsub.f32 %v1122, %v1860
    %v1862 = vand.u32 %v1861, 4294901760
    %1863 = vmatpush1.msra.mxu0 %v1862
    %v1864 = vand.u32 %v1125, 4294901760
    %v1865 = vsub.f32 %v1125, %v1864
    %v1866 = vand.u32 %v1865, 4294901760
    %1867 = vmatprep.subr.mxu0 %v1866
    %v1868 = vand.u32 %v1124, 4294901760
    %v1869 = vsub.f32 %v1124, %v1868
    %v1870 = vand.u32 %v1869, 4294901760
    %1871 = vmatpush1.msra.mxu0 %v1870
    %1872 = vmatprep.subr.mxu0 0.0
    %1873 = vmatpush1.msra.mxu0 0.0
    %1874 = vmatprep.subr.mxu0 0.0
    %1875 = vmatpush1.msra.mxu0 0.0
    %1876 = vmatprep.subr.mxu0 0.0
    %1877 = vmatpush1.msra.mxu0 0.0
    %1878 = vmatprep.subr.mxu0 0.0
    %1879 = vmatpush1.msra.mxu0 0.0
    %1880 = vmatprep.subr.mxu0 0.0
    %1881 = vmatpush1.msra.mxu0 0.0
    %1882 = vmatprep.subr.mxu0 0.0
    %1883 = vmatpush1.msra.mxu0 0.0
    %1884 = vmatprep.subr.mxu0 0.0
    %1885 = vmatpush1.msra.mxu0 0.0
    %1886 = vmatprep.subr.mxu0 0.0
    %1887 = vmatpush1.msra.mxu0 0.0
    %1888 = vmatprep.subr.mxu0 0.0
    %1889 = vmatpush1.msra.mxu0 0.0
    %1890 = vmatprep.subr.mxu0 0.0
    %1891 = vmatpush1.msra.mxu0 0.0
    %1892 = vmatprep.subr.mxu0 0.0
    %1893 = vmatpush1.msra.mxu0 0.0
    %1894 = vmatprep.subr.mxu0 0.0
    %1895 = vmatpush1.msra.mxu0 0.0
    %1896 = vmatprep.subr.mxu0 0.0
    %1897 = vmatpush1.msra.mxu0 0.0
    %1898 = vmatprep.subr.mxu0 0.0
    %1899 = vmatpush1.msra.mxu0 0.0
    %1900 = vmatprep.subr.mxu0 0.0
    %1901 = vmatpush1.msra.mxu0 0.0
    %1902 = vmatprep.subr.mxu0 0.0
    %1903 = vmatpush1.msra.mxu0 0.0
    %1904 = vmatprep.mubr.f32.mxu0 0.0
    %v1905 = vand.u32 %v1090, 4294901760
    %1906 = vmatmul.mubr.f32.gmra.mrb[0].mxu0 %v1905
    %v1907 = vpop.f32.mrb[0].mxu0
    %v1908 = vadd.f32 %v1731, %v1907
    %v1909 = vpop.f32.mrb[0].mxu0
    %v1910 = vadd.f32 %v1733, %v1909
    %1911 = vmatprep.mubr.f32.mxu0 0.0
    %v1912 = vand.u32 %v1091, 4294901760
    %1913 = vmatmul.mubr.f32.gmra.mrb[0].mxu0 %v1912
    %v1914 = vpop.f32.mrb[0].mxu0
    %v1915 = vadd.f32 %v1740, %v1914
    %v1916 = vpop.f32.mrb[0].mxu0
    %v1917 = vadd.f32 %v1742, %v1916
    %1918 = vdwg.mxu0
    %v1919 = vand.u32 %v1095, 4294901760
    %1920 = vmatprep.subr.mxu0 %v1919
    %v1921 = vand.u32 %v1094, 4294901760
    %1922 = vmatpush1.msra.mxu0 %v1921
    %v1923 = vand.u32 %v1097, 4294901760
    %1924 = vmatprep.subr.mxu0 %v1923
    %v1925 = vand.u32 %v1096, 4294901760
    %1926 = vmatpush1.msra.mxu0 %v1925
    %v1927 = vand.u32 %v1099, 4294901760
    %1928 = vmatprep.subr.mxu0 %v1927
    %v1929 = vand.u32 %v1098, 4294901760
    %1930 = vmatpush1.msra.mxu0 %v1929
    %v1931 = vand.u32 %v1101, 4294901760
    %1932 = vmatprep.subr.mxu0 %v1931
    %v1933 = vand.u32 %v1100, 4294901760
    %1934 = vmatpush1.msra.mxu0 %v1933
    %v1935 = vand.u32 %v1103, 4294901760
    %1936 = vmatprep.subr.mxu0 %v1935
    %v1937 = vand.u32 %v1102, 4294901760
    %1938 = vmatpush1.msra.mxu0 %v1937
    %v1939 = vand.u32 %v1105, 4294901760
    %1940 = vmatprep.subr.mxu0 %v1939
    %v1941 = vand.u32 %v1104, 4294901760
    %1942 = vmatpush1.msra.mxu0 %v1941
    %v1943 = vand.u32 %v1107, 4294901760
    %1944 = vmatprep.subr.mxu0 %v1943
    %v1945 = vand.u32 %v1106, 4294901760
    %1946 = vmatpush1.msra.mxu0 %v1945
    %v1947 = vand.u32 %v1109, 4294901760
    %1948 = vmatprep.subr.mxu0 %v1947
    %v1949 = vand.u32 %v1108, 4294901760
    %1950 = vmatpush1.msra.mxu0 %v1949
    %v1951 = vand.u32 %v1111, 4294901760
    %1952 = vmatprep.subr.mxu0 %v1951
    %v1953 = vand.u32 %v1110, 4294901760
    %1954 = vmatpush1.msra.mxu0 %v1953
    %v1955 = vand.u32 %v1113, 4294901760
    %1956 = vmatprep.subr.mxu0 %v1955
    %v1957 = vand.u32 %v1112, 4294901760
    %1958 = vmatpush1.msra.mxu0 %v1957
    %v1959 = vand.u32 %v1115, 4294901760
    %1960 = vmatprep.subr.mxu0 %v1959
    %v1961 = vand.u32 %v1114, 4294901760
    %1962 = vmatpush1.msra.mxu0 %v1961
    %v1963 = vand.u32 %v1117, 4294901760
    %1964 = vmatprep.subr.mxu0 %v1963
    %v1965 = vand.u32 %v1116, 4294901760
    %1966 = vmatpush1.msra.mxu0 %v1965
    %v1967 = vand.u32 %v1119, 4294901760
    %1968 = vmatprep.subr.mxu0 %v1967
    %v1969 = vand.u32 %v1118, 4294901760
    %1970 = vmatpush1.msra.mxu0 %v1969
    %v1971 = vand.u32 %v1121, 4294901760
    %1972 = vmatprep.subr.mxu0 %v1971
    %v1973 = vand.u32 %v1120, 4294901760
    %1974 = vmatpush1.msra.mxu0 %v1973
    %v1975 = vand.u32 %v1123, 4294901760
    %1976 = vmatprep.subr.mxu0 %v1975
    %v1977 = vand.u32 %v1122, 4294901760
    %1978 = vmatpush1.msra.mxu0 %v1977
    %v1979 = vand.u32 %v1125, 4294901760
    %1980 = vmatprep.subr.mxu0 %v1979
    %v1981 = vand.u32 %v1124, 4294901760
    %1982 = vmatpush1.msra.mxu0 %v1981
    %1983 = vmatprep.subr.mxu0 0.0
    %1984 = vmatpush1.msra.mxu0 0.0
    %1985 = vmatprep.subr.mxu0 0.0
    %1986 = vmatpush1.msra.mxu0 0.0
    %1987 = vmatprep.subr.mxu0 0.0
    %1988 = vmatpush1.msra.mxu0 0.0
    %1989 = vmatprep.subr.mxu0 0.0
    %1990 = vmatpush1.msra.mxu0 0.0
    %1991 = vmatprep.subr.mxu0 0.0
    %1992 = vmatpush1.msra.mxu0 0.0
    %1993 = vmatprep.subr.mxu0 0.0
    %1994 = vmatpush1.msra.mxu0 0.0
    %1995 = vmatprep.subr.mxu0 0.0
    %1996 = vmatpush1.msra.mxu0 0.0
    %1997 = vmatprep.subr.mxu0 0.0
    %1998 = vmatpush1.msra.mxu0 0.0
    %1999 = vmatprep.subr.mxu0 0.0
    %2000 = vmatpush1.msra.mxu0 0.0
    %2001 = vmatprep.subr.mxu0 0.0
    %2002 = vmatpush1.msra.mxu0 0.0
    %2003 = vmatprep.subr.mxu0 0.0
    %2004 = vmatpush1.msra.mxu0 0.0
    %2005 = vmatprep.subr.mxu0 0.0
    %2006 = vmatpush1.msra.mxu0 0.0
    %2007 = vmatprep.subr.mxu0 0.0
    %2008 = vmatpush1.msra.mxu0 0.0
    %2009 = vmatprep.subr.mxu0 0.0
    %2010 = vmatpush1.msra.mxu0 0.0
    %2011 = vmatprep.subr.mxu0 0.0
    %2012 = vmatpush1.msra.mxu0 0.0
    %2013 = vmatprep.subr.mxu0 0.0
    %2014 = vmatpush1.msra.mxu0 0.0
    %2015 = vmatprep.mubr.f32.mxu0 0.0
    %v2016 = vand.u32 %v1090, 4294901760
    %2017 = vmatmul.mubr.f32.gmra.mrb[0].mxu0 %v2016
    %v2018 = vpop.f32.mrb[0].mxu0
    %v2019 = vadd.f32 %v1908, %v2018
    %v2020 = vpop.f32.mrb[0].mxu0
    %v2021 = vadd.f32 %v1910, %v2020
    %2022 = vmatprep.mubr.f32.mxu0 0.0
    %v2023 = vand.u32 %v1091, 4294901760
    %2024 = vmatmul.mubr.f32.gmra.mrb[0].mxu0 %v2023
    %v2025 = vpop.f32.mrb[0].mxu0
    %v2026 = vadd.f32 %v1915, %v2025
    %v2027 = vpop.f32.mrb[0].mxu0
    %v2028 = vadd.f32 %v1917, %v2027
    %2029 = vdwg.mxu0
    %v2030 = vmul.f32 %v2019, %v2019
    %v2031 = vmul.f32 %v2026, %v2026
    %v2032 = vmul.f32 %v2021, %v2021
    %v2033 = vmul.f32 %v2028, %v2028
    %v2034 = vadd.f32 %v2030, %v2032
    %v2035 = vadd.f32 %v2031, %v2033
    %v2036 = vrsqrt.pop %v2034
    %v2037 = vmul.f32 %v2034, %v2036
    %vm2038 = vcmp.eq.f32.partialorder %v2034, inf
    %v2039 = vsel %vm2038, %v2034, %v2037
    %vm2040 = vcmp.eq.f32.partialorder %v2034, 0.0
    %v2041 = vand.u32 %v2034, 2147483648
    %v2042 = vsel %vm2040, %v2041, %v2039
    %v2043 = vrsqrt.pop %v2035
    %v2044 = vmul.f32 %v2035, %v2043
    %vm2045 = vcmp.eq.f32.partialorder %v2035, inf
    %v2046 = vsel %vm2045, %v2035, %v2044
    %vm2047 = vcmp.eq.f32.partialorder %v2035, 0.0
    %v2048 = vand.u32 %v2035, 2147483648
    %v2049 = vsel %vm2047, %v2048, %v2046
    %v2050 = vld [vmem:[%s6] sm:$0xff]
    %v2051 = vmul.f32 %v2042, %v2050
    %v2052 = vmul.f32 %v2049, %v2050
    %v2053 = vld [vmem:[%s7] sm:$0x1]
    %v2055 = vlaneseq
    %v2056 = vshrl.u32 %v2055, 7
    %v2057 = vsub.s32 0, %v2056
    %v2058 = vrot.slane %v2053, %v2057
    %v2060 = vmul.f32 %v2051, %v2058
    %v2061 = vmul.f32 %v2052, %v2058
    %2062 = vadd.xlane.f32.xlu0 %v2060
    %v2063 = vpop.xlane.xlu0 %2062
    %2064 = vadd.xlane.f32.xlu0 %v2061
    %v2065 = vpop.xlane.xlu0 %2064
    %2066 = vadd.xlane.f32.xlu0 %v2051
    %v2067 = vpop.xlane.xlu0 %2066
    %2068 = vadd.xlane.f32.xlu0 %v2052
    %v2069 = vpop.xlane.xlu0 %2068
    %v2070 = vrcp.pop %v2067
    %v2071 = vmul.f32 %v2063, %v2070
    %v2072 = vrcp.pop %v2069
    %v2073 = vmul.f32 %v2065, %v2072
    %vm2074 = vcmask 7168
    %v2075 = vsel %vm2074, %v2071, %v2073
    %v2076 = vld [vmem:[%s8] sm:$0xff]
    %v2077 = vsub.f32 %v2075, %v2076
    %v2078 = vand.u32 2147483647, %v2077
    %vm2079 = vcmask 15360
    %v2080 = vsel %vm2079, %v2078, 0.0
    %2081 = vadd.xlane.f32.xlu0 %v2080
    %v2082 = vpop.xlane.xlu0 %2081
    %v2083 = vrcp.pop 2.0
    %v2084 = vmul.f32 %v2082, %v2083
    %v2085 = vsub.f32 %v2078, %v2084
    %v2086 = vmul.f32 %v2085, %v2085
    %v2087 = vsel %vm2079, %v2086, 0.0
    %2088 = vadd.xlane.f32.xlu0 %v2087
    %v2089 = vpop.xlane.xlu0 %2088
    %v2090 = vmul.f32 %v2089, %v2083
    %v2091 = vadd.f32 %v2090, 1e-05
    %v2092 = vrsqrt.pop %v2091
    %v2093 = vmul.f32 %v2085, %v2092
    %v2094 = vand.u32 2147483647, %v787
    %v2095 = vand.u32 2147483647, %v788
    %2096 = vadd.xlane.f32.xlu0 %v2094
    %v2097 = vpop.xlane.xlu0 %2096
    %2098 = vadd.xlane.f32.xlu0 %v2095
    %v2099 = vpop.xlane.xlu0 %2098
    %v2100 = vrcp.pop 128.0
    %v2101 = vmul.f32 %v2097, %v2100
    %v2102 = vmul.f32 %v2099, %v2100
    %v2103 = vsel %vm2074, %v2101, %v2102
    %v2104 = vld [vmem:[%s9] sm:$0xff]
    %v2105 = vld [vmem:[%s10] sm:$0xff]
    %2107 = vset.pattern.permute.xlu0 0
    %2108 = vperm.xlu0 %2107, %v2105
    %v2109 = vpop.permute.xlu0 %2108
    %vm2111 = vcmask 64512
    %v2113 = vsel %vm2111, %v2104, 0
    %2115 = vmatprep.subr.mxu0 0.0
    %2116 = vmatpush1.msra.mxu0 %v2093
    %2117 = vmatprep.subr.mxu0 0.0
    %2118 = vmatpush1.msra.mxu0 0.0
    %2119 = vmatprep.subr.mxu0 0.0
    %2120 = vmatpush1.msra.mxu0 0.0
    %2121 = vmatprep.subr.mxu0 0.0
    %2122 = vmatpush1.msra.mxu0 0.0
    %2123 = vmatprep.subr.mxu0 0.0
    %2124 = vmatpush1.msra.mxu0 0.0
    %2125 = vmatprep.subr.mxu0 0.0
    %2126 = vmatpush1.msra.mxu0 0.0
    %2127 = vmatprep.subr.mxu0 0.0
    %2128 = vmatpush1.msra.mxu0 0.0
    %2129 = vmatprep.subr.mxu0 0.0
    %2130 = vmatpush1.msra.mxu0 0.0
    %2131 = vmatprep.subr.mxu0 0.0
    %2132 = vmatpush1.msra.mxu0 0.0
    %2133 = vmatprep.subr.mxu0 0.0
    %2134 = vmatpush1.msra.mxu0 0.0
    %2135 = vmatprep.subr.mxu0 0.0
    %2136 = vmatpush1.msra.mxu0 0.0
    %2137 = vmatprep.subr.mxu0 0.0
    %2138 = vmatpush1.msra.mxu0 0.0
    %2139 = vmatprep.subr.mxu0 0.0
    %2140 = vmatpush1.msra.mxu0 0.0
    %2141 = vmatprep.subr.mxu0 0.0
    %2142 = vmatpush1.msra.mxu0 0.0
    %2143 = vmatprep.subr.mxu0 0.0
    %2144 = vmatpush1.msra.mxu0 0.0
    %2145 = vmatprep.subr.mxu0 0.0
    %2146 = vmatpush1.msra.mxu0 0.0
    %2147 = vmatprep.subr.mxu0 0.0
    %2148 = vmatpush1.msra.mxu0 0.0
    %2149 = vmatprep.subr.mxu0 0.0
    %2150 = vmatpush1.msra.mxu0 0.0
    %2151 = vmatprep.subr.mxu0 0.0
    %2152 = vmatpush1.msra.mxu0 0.0
    %2153 = vmatprep.subr.mxu0 0.0
    %2154 = vmatpush1.msra.mxu0 0.0
    %2155 = vmatprep.subr.mxu0 0.0
    %2156 = vmatpush1.msra.mxu0 0.0
    %2157 = vmatprep.subr.mxu0 0.0
    %2158 = vmatpush1.msra.mxu0 0.0
    %2159 = vmatprep.subr.mxu0 0.0
    %2160 = vmatpush1.msra.mxu0 0.0
    %2161 = vmatprep.subr.mxu0 0.0
    %2162 = vmatpush1.msra.mxu0 0.0
    %2163 = vmatprep.subr.mxu0 0.0
    %2164 = vmatpush1.msra.mxu0 0.0
    %2165 = vmatprep.subr.mxu0 0.0
    %2166 = vmatpush1.msra.mxu0 0.0
    %2167 = vmatprep.subr.mxu0 0.0
    %2168 = vmatpush1.msra.mxu0 0.0
    %2169 = vmatprep.subr.mxu0 0.0
    %2170 = vmatpush1.msra.mxu0 0.0
    %2171 = vmatprep.subr.mxu0 0.0
    %2172 = vmatpush1.msra.mxu0 0.0
    %2173 = vmatprep.subr.mxu0 0.0
    %2174 = vmatpush1.msra.mxu0 0.0
    %2175 = vmatprep.subr.mxu0 0.0
    %2176 = vmatpush1.msra.mxu0 0.0
    %2177 = vmatprep.subr.mxu0 0.0
    %2178 = vmatpush1.msra.mxu0 0.0
    %2179 = vmatprep.mubr.f32.mxu0 0.0
    %2180 = vmatmul.mubr.f32.gmra.mrb[0].mxu0 %v2113
    %v2181 = vpop.f32.mrb[0].mxu0
    %v2182 = vadd.f32 %v2109, %v2181
    %v2183 = vpop.f32.mrb[0].mxu0
    %2184 = vdwg.mxu0
    %v2185 = vmax.f32 %v2182, 0.0
    %v2186 = vld [vmem:[%s11] sm:$0xff]
    %v2187 = vld [vmem:[%s12] sm:$0xff]
    %2189 = vset.pattern.permute.xlu0 0
    %2190 = vperm.xlu0 %2189, %v2187
    %v2191 = vpop.permute.xlu0 %2190
    %v2194 = vsel %vm2111, %v2186, 0
    %2196 = vmatprep.subr.mxu0 0.0
    %2197 = vmatpush1.msra.mxu0 %v2185
    %2198 = vmatprep.subr.mxu0 0.0
    %2199 = vmatpush1.msra.mxu0 0.0
    %2200 = vmatprep.subr.mxu0 0.0
    %2201 = vmatpush1.msra.mxu0 0.0
    %2202 = vmatprep.subr.mxu0 0.0
    %2203 = vmatpush1.msra.mxu0 0.0
    %2204 = vmatprep.subr.mxu0 0.0
    %2205 = vmatpush1.msra.mxu0 0.0
    %2206 = vmatprep.subr.mxu0 0.0
    %2207 = vmatpush1.msra.mxu0 0.0
    %2208 = vmatprep.subr.mxu0 0.0
    %2209 = vmatpush1.msra.mxu0 0.0
    %2210 = vmatprep.subr.mxu0 0.0
    %2211 = vmatpush1.msra.mxu0 0.0
    %2212 = vmatprep.subr.mxu0 0.0
    %2213 = vmatpush1.msra.mxu0 0.0
    %2214 = vmatprep.subr.mxu0 0.0
    %2215 = vmatpush1.msra.mxu0 0.0
    %2216 = vmatprep.subr.mxu0 0.0
    %2217 = vmatpush1.msra.mxu0 0.0
    %2218 = vmatprep.subr.mxu0 0.0
    %2219 = vmatpush1.msra.mxu0 0.0
    %2220 = vmatprep.subr.mxu0 0.0
    %2221 = vmatpush1.msra.mxu0 0.0
    %2222 = vmatprep.subr.mxu0 0.0
    %2223 = vmatpush1.msra.mxu0 0.0
    %2224 = vmatprep.subr.mxu0 0.0
    %2225 = vmatpush1.msra.mxu0 0.0
    %2226 = vmatprep.subr.mxu0 0.0
    %2227 = vmatpush1.msra.mxu0 0.0
    %2228 = vmatprep.subr.mxu0 0.0
    %2229 = vmatpush1.msra.mxu0 0.0
    %2230 = vmatprep.subr.mxu0 0.0
    %2231 = vmatpush1.msra.mxu0 0.0
    %2232 = vmatprep.subr.mxu0 0.0
    %2233 = vmatpush1.msra.mxu0 0.0
    %2234 = vmatprep.subr.mxu0 0.0
    %2235 = vmatpush1.msra.mxu0 0.0
    %2236 = vmatprep.subr.mxu0 0.0
    %2237 = vmatpush1.msra.mxu0 0.0
    %2238 = vmatprep.subr.mxu0 0.0
    %2239 = vmatpush1.msra.mxu0 0.0
    %2240 = vmatprep.subr.mxu0 0.0
    %2241 = vmatpush1.msra.mxu0 0.0
    %2242 = vmatprep.subr.mxu0 0.0
    %2243 = vmatpush1.msra.mxu0 0.0
    %2244 = vmatprep.subr.mxu0 0.0
    %2245 = vmatpush1.msra.mxu0 0.0
    %2246 = vmatprep.subr.mxu0 0.0
    %2247 = vmatpush1.msra.mxu0 0.0
    %2248 = vmatprep.subr.mxu0 0.0
    %2249 = vmatpush1.msra.mxu0 0.0
    %2250 = vmatprep.subr.mxu0 0.0
    %2251 = vmatpush1.msra.mxu0 0.0
    %2252 = vmatprep.subr.mxu0 0.0
    %2253 = vmatpush1.msra.mxu0 0.0
    %2254 = vmatprep.subr.mxu0 0.0
    %2255 = vmatpush1.msra.mxu0 0.0
    %2256 = vmatprep.subr.mxu0 0.0
    %2257 = vmatpush1.msra.mxu0 0.0
    %2258 = vmatprep.subr.mxu0 0.0
    %2259 = vmatpush1.msra.mxu0 0.0
    %2260 = vmatprep.mubr.f32.mxu0 0.0
    %2261 = vmatmul.mubr.f32.gmra.mrb[0].mxu0 %v2194
    %v2262 = vpop.f32.mrb[0].mxu0
    %v2263 = vadd.f32 %v2191, %v2262
    %v2264 = vpop.f32.mrb[0].mxu0
    %2265 = vdwg.mxu0
    %v2266 = vtanh.pop %v2263
    %v2267 = vmul.f32 %v2266, 1.5
    %v2268 = vadd.f32 %v2267, 0.5
    %v2269 = vld [vmem:[%s13] sm:$0xff]
    %v2270 = vld [vmem:[%s14] sm:$0xff]
    %2272 = vset.pattern.permute.xlu0 0
    %2273 = vperm.xlu0 %2272, %v2270
    %v2274 = vpop.permute.xlu0 %2273
    %v2277 = vsel %vm2111, %v2269, 0
    %2279 = vmatprep.subr.mxu0 0.0
    %2280 = vmatpush1.msra.mxu0 %v2103
    %2281 = vmatprep.subr.mxu0 0.0
    %2282 = vmatpush1.msra.mxu0 0.0
    %2283 = vmatprep.subr.mxu0 0.0
    %2284 = vmatpush1.msra.mxu0 0.0
    %2285 = vmatprep.subr.mxu0 0.0
    %2286 = vmatpush1.msra.mxu0 0.0
    %2287 = vmatprep.subr.mxu0 0.0
    %2288 = vmatpush1.msra.mxu0 0.0
    %2289 = vmatprep.subr.mxu0 0.0
    %2290 = vmatpush1.msra.mxu0 0.0
    %2291 = vmatprep.subr.mxu0 0.0
    %2292 = vmatpush1.msra.mxu0 0.0
    %2293 = vmatprep.subr.mxu0 0.0
    %2294 = vmatpush1.msra.mxu0 0.0
    %2295 = vmatprep.subr.mxu0 0.0
    %2296 = vmatpush1.msra.mxu0 0.0
    %2297 = vmatprep.subr.mxu0 0.0
    %2298 = vmatpush1.msra.mxu0 0.0
    %2299 = vmatprep.subr.mxu0 0.0
    %2300 = vmatpush1.msra.mxu0 0.0
    %2301 = vmatprep.subr.mxu0 0.0
    %2302 = vmatpush1.msra.mxu0 0.0
    %2303 = vmatprep.subr.mxu0 0.0
    %2304 = vmatpush1.msra.mxu0 0.0
    %2305 = vmatprep.subr.mxu0 0.0
    %2306 = vmatpush1.msra.mxu0 0.0
    %2307 = vmatprep.subr.mxu0 0.0
    %2308 = vmatpush1.msra.mxu0 0.0
    %2309 = vmatprep.subr.mxu0 0.0
    %2310 = vmatpush1.msra.mxu0 0.0
    %2311 = vmatprep.subr.mxu0 0.0
    %2312 = vmatpush1.msra.mxu0 0.0
    %2313 = vmatprep.subr.mxu0 0.0
    %2314 = vmatpush1.msra.mxu0 0.0
    %2315 = vmatprep.subr.mxu0 0.0
    %2316 = vmatpush1.msra.mxu0 0.0
    %2317 = vmatprep.subr.mxu0 0.0
    %2318 = vmatpush1.msra.mxu0 0.0
    %2319 = vmatprep.subr.mxu0 0.0
    %2320 = vmatpush1.msra.mxu0 0.0
    %2321 = vmatprep.subr.mxu0 0.0
    %2322 = vmatpush1.msra.mxu0 0.0
    %2323 = vmatprep.subr.mxu0 0.0
    %2324 = vmatpush1.msra.mxu0 0.0
    %2325 = vmatprep.subr.mxu0 0.0
    %2326 = vmatpush1.msra.mxu0 0.0
    %2327 = vmatprep.subr.mxu0 0.0
    %2328 = vmatpush1.msra.mxu0 0.0
    %2329 = vmatprep.subr.mxu0 0.0
    %2330 = vmatpush1.msra.mxu0 0.0
    %2331 = vmatprep.subr.mxu0 0.0
    %2332 = vmatpush1.msra.mxu0 0.0
    %2333 = vmatprep.subr.mxu0 0.0
    %2334 = vmatpush1.msra.mxu0 0.0
    %2335 = vmatprep.subr.mxu0 0.0
    %2336 = vmatpush1.msra.mxu0 0.0
    %2337 = vmatprep.subr.mxu0 0.0
    %2338 = vmatpush1.msra.mxu0 0.0
    %2339 = vmatprep.subr.mxu0 0.0
    %2340 = vmatpush1.msra.mxu0 0.0
    %2341 = vmatprep.subr.mxu0 0.0
    %2342 = vmatpush1.msra.mxu0 0.0
    %2343 = vmatprep.mubr.f32.mxu0 0.0
    %2344 = vmatmul.mubr.f32.gmra.mrb[0].mxu0 %v2277
    %v2345 = vpop.f32.mrb[0].mxu0
    %v2346 = vadd.f32 %v2274, %v2345
    %v2347 = vpop.f32.mrb[0].mxu0
    %2348 = vdwg.mxu0
    %v2349 = vtanh.pop %v2346
    %v2350 = vmul.f32 %v2349, 2.0
    %v2351 = vadd.f32 %v2350, 3.0
    %v2352 = vadd.f32 %v2351, %v2268
    %2353 = vrot.lane.b32.xlu0 %v787, 15
    %v2354 = vpop.permute.xlu0 %2353
    %2355 = vrot.lane.b32.xlu0 %v788, 15
    %v2356 = vpop.permute.xlu0 %2355
    %2358 = vrot.lane.b32.xlu0 %v2352, 127
    %v2359 = vpop.permute.xlu0 %2358
    %2361 = vrot.lane.b32.xlu0 %v2093, 127
    %v2362 = vpop.permute.xlu0 %2361
    %v2363 = vsel %vm744, %v2354, 0.0
    %v2364 = vsel %vm744, %v2356, 0.0
    %vm2365 = vcmp.eq.s32.totalorder %v71, 15
    %2366 = vset.pattern.permute.xlu0 0
    %2367 = vperm.xlu0 %2366, %v2352
    %v2368 = vpop.permute.xlu0 %2367
    %2370 = vset.pattern.permute.xlu0 0
    %2371 = vperm.xlu0 %2370, %v2359
    %v2372 = vpop.permute.xlu0 %2371
    %v2374 = vsel %vm2365, %v2368, %v2363
    %v2375 = vsel %vm2365, %v2372, %v2364
    %vm2376 = vcmp.eq.s32.totalorder %v71, 16
    %2377 = vset.pattern.permute.xlu0 0
    %2378 = vperm.xlu0 %2377, %v2093
    %v2379 = vpop.permute.xlu0 %2378
    %2381 = vset.pattern.permute.xlu0 0
    %2382 = vperm.xlu0 %2381, %v2362
    %v2383 = vpop.permute.xlu0 %2382
    %v2385 = vsel %vm2376, %v2379, %v2374
    %v2386 = vsel %vm2376, %v2383, %v2375
    %2387 = vst [vmem:[%s16] sm:$0xff] %v2385
    %2388 = vst [vmem:[%s16 + $0x8] sm:$0xff] %v2386
    // Predicated region
    $region66: #{filter_network_forward.1} parent=1 // pred_check
      _
    $region67: #{filter_network_forward.1} parent=1 // pred_check_branch
      %2390 = sbr.rel (0) target = $region69
    $region68: #{filter_network_forward.1} parent=1 // pred_region
      %s2392 = ssub.s32 256, 256
      %2393 = vsyncadd [#allocation4], %s2392
      %s2394 = sshll.u32 [#allocation5], 4
      %s2395 = int_to_ptr.vmem [resolvable:$true] %s2394
      %2400 = dma.vmem_to_hbm [thread:$0]  %s2395, 256, %s15, [#allocation4], 128, 128, 8
    $region69: #{filter_network_forward.1} parent=1 // pred_fallthru
      _
    // Predicated region
    $region70: #{filter_network_forward.1} parent=1 // pred_check
      _
    $region71: #{filter_network_forward.1} parent=1 // pred_check_branch
      %2402 = sbr.rel (0) target = $region73
    $region72: #{filter_network_forward.1} parent=1 // pred_region
      _
    $region73: #{filter_network_forward.1} parent=1 // pred_fallthru
      _
    // Predicated region
    $region74: #{filter_network_forward.1} parent=1 // pred_check
      _
    $region75: #{filter_network_forward.1} parent=1 // pred_check_branch
      %2404 = sbr.rel (0) target = $region77
    $region76: #{filter_network_forward.1} parent=1 // pred_region
      %2405 = dma.done [#allocation4], 256
    $region77: #{filter_network_forward.1} parent=1 // pred_fallthru
      _
    // Predicated region
    $region78: #{filter_network_forward.1} parent=1 // pred_check
      _
    $region79: #{filter_network_forward.1} parent=1 // pred_check_branch
      %2407 = sbr.rel (0) target = $region81
    $region80: #{filter_network_forward.1} parent=1 // pred_region
      _
    $region81: #{filter_network_forward.1} parent=1 // pred_fallthru
      _
    %2408 = vsyncpa [#allocation3], 1
    %2409 = vsyncpa [#allocation4], 1

</llo_original>
